<compile_context>
chip_gen: v7x
topology: tpu7x:2x2x1
jax: 0.10.0
libtpu: 0.0.40
codegen_flags: <defaults>
</compile_context>

<pallas_src>
import functools

import jax
import jax.numpy as jnp
from jax import lax
from jax.experimental import pallas as pl
from jax.experimental.pallas import tpu as pltpu

# ---- config (stand-ins for conf.*) ------------------------------------------
NUM_USERS = 10
NUM_ITEMS = 12
EMBED_DIM = 32     # conf.embedding_dim
HIDDEN = 32        # conf.hidden_size
VOCAB = 50         # conf.vocab_sz
VOCAB_PAD = 128    # vocab lane-padded so the logits block is full-lane
SEQ_LEN = 8
BATCH = 2
AVG_RATING = 3.5


# ---- fused kernel: rating MSE + GRU recurrence + vocab NLL ------------------
def _fused_kernel(u_ref, i_ref, x_ref, gru_ref, head_ref, tgt_ref,
                  pred_ref, loss_ref, *, seq_len, batch, emb_dim, hidden):
    # ---------------- rating path (prologue) ---------------------------------
    # u_ref: (2B, D+1) = [user_aspect ; user_free] with the label packed as
    # the last column of the first B rows.  i_ref: (2B, D) = [item_aspect ;
    # item_free].  Reduction over the lane (D) axis -> (2B, 1).
    u_emb = u_ref[:, 0:emb_dim]                                     # (2B, D)
    lbl = u_ref[0:batch, emb_dim:emb_dim + 1]                       # (B, 1)
    sums = jnp.sum(u_emb * i_ref[...], axis=-1, keepdims=True)      # (2B, 1)
    pred = sums[0:batch] + sums[batch:2 * batch] + AVG_RATING       # (B, 1)
    pred_ref[...] = pred
    diff = pred - lbl
    rating_loss = jnp.sum(diff * diff, keepdims=True) * (1.0 / batch)  # (1, 1)

    # ---------------- unpack GRU weights (one packed slab) -------------------
    w_ih = gru_ref[0:emb_dim, :]                                    # (D, 3H)
    w_hh = gru_ref[emb_dim:emb_dim + hidden, :]                     # (H, 3H)
    b_i = gru_ref[emb_dim + hidden:emb_dim + hidden + 1, :]         # (1, 3H)
    b_hn = gru_ref[emb_dim + hidden + 1:emb_dim + hidden + 2, 0:hidden]
    b_hn_b = jnp.broadcast_to(b_hn, (batch, hidden))                # hoisted

    # ---------------- hoisted, gate-fused input projection -------------------
    gi = jnp.dot(x_ref[...], w_ih, preferred_element_type=jnp.float32) + b_i

    # ---------------- fully unrolled GRU recurrence (static S) ---------------
    h = jnp.zeros((batch, hidden), jnp.float32)
    hs = []
    for t in range(seq_len):            # static trip count -> static slices
        lo = t * batch
        gi_t = gi[lo:lo + batch, :]                                 # (B, 3H)
        gh = jnp.dot(h, w_hh, preferred_element_type=jnp.float32)   # (B, 3H)
        a_r = gi_t[:, 0:hidden] + gh[:, 0:hidden]
        a_z = gi_t[:, hidden:2 * hidden] + gh[:, hidden:2 * hidden]
        r = 0.5 * (jnp.tanh(0.5 * a_r) + 1.0)   # sigmoid, single EUP push
        z = 0.5 * (jnp.tanh(0.5 * a_z) + 1.0)
        n = jnp.tanh(gi_t[:, 2 * hidden:3 * hidden]
                     + r * (gh[:, 2 * hidden:3 * hidden] + b_hn_b))
        h = (1.0 - z) * n + z * h
        hs.append(h)
    feats = jnp.concatenate(hs, axis=0)                             # (S*B, H)

    # ---------------- review loss epilogue: projection + log-softmax NLL -----
    # TODO(synk): exact full log-softmax NLL stands in for
    # nn.AdaptiveLogSoftmaxWithLoss (clustered cutoffs).
    w_out = head_ref[0:hidden, :]                                   # (H, Vpad)
    b_out = head_ref[hidden:hidden + 1, :]                          # (1, Vpad)
    logits = (jnp.dot(feats, w_out, preferred_element_type=jnp.float32)
              + b_out)                                              # (S*B, Vpad)
    m = jnp.max(logits, axis=-1, keepdims=True)
    lse = m + jnp.log(jnp.sum(jnp.exp(logits - m), axis=-1, keepdims=True))
    # integer targets + lane-iota compare replaces the (S*B, V) one-hot input
    col = lax.broadcasted_iota(jnp.int32, logits.shape, 1)
    tgt_logit = jnp.sum(jnp.where(col == tgt_ref[...], logits, 0.0),
                        axis=-1, keepdims=True)                     # (S*B, 1)
    nll = lse - tgt_logit
    review_loss = jnp.sum(nll, keepdims=True) * (1.0 / (seq_len * batch))

    loss_ref[...] = rating_loss + review_loss                       # (1, 1)


def aspect_rs_fused(u_slab, i_slab, x_flat, gru_pack, head_pack, tgt):
    two_b, d_p1 = u_slab.shape
    batch = two_b // 2
    emb_dim = d_p1 - 1
    s_b = x_flat.shape[0]
    seq_len = s_b // batch
    hidden = gru_pack.shape[1] // 3
    vmem = pl.BlockSpec(memory_space=pltpu.MemorySpace.VMEM)
    pred, loss = pl.pallas_call(
        functools.partial(_fused_kernel, seq_len=seq_len, batch=batch,
                          emb_dim=emb_dim, hidden=hidden),
        out_shape=(jax.ShapeDtypeStruct((batch, 1), jnp.float32),
                   jax.ShapeDtypeStruct((1, 1), jnp.float32)),
        in_specs=[vmem] * 6,
        out_specs=(vmem, vmem),
    )(u_slab, i_slab, x_flat, gru_pack, head_pack, tgt)
    return pred, loss


# ---- full forward (gather glue in plain JAX, everything else in the kernel) --
def aspect_rs_forward(params, user, item, review_input, label, review_output):
    batch = user.shape[0]
    # embedding lookups (data-dependent row gathers -> plain-JAX glue)
    ua = jnp.take(params["user_aspect"], user, axis=0)      # (B, D)
    uf = jnp.take(params["user_free"], user, axis=0)        # (B, D)
    ia = jnp.take(params["item_aspect"], item, axis=0)      # (B, D)
    ifr = jnp.take(params["item_free"], item, axis=0)       # (B, D)
    # pack the user-side embeddings + the label column into one slab, and the
    # item-side embeddings into another, so the kernel sees few input DMAs
    lbl_col = jnp.concatenate(
        [label.reshape(batch, 1).astype(jnp.float32),
         jnp.zeros((batch, 1), jnp.float32)], axis=0)                # (2B, 1)
    u_slab = jnp.concatenate(
        [jnp.concatenate([ua, uf], axis=0), lbl_col], axis=1)        # (2B, D+1)
    i_slab = jnp.concatenate([ia, ifr], axis=0)                      # (2B, D)

    # review path glue: word-embedding gather (time-major flatten) + int32
    # targets (no one-hot matrix; the kernel does an iota compare)
    x_flat = jnp.take(params["word_emb"], review_input.reshape(-1), axis=0)
    tgt = review_output.reshape(-1, 1).astype(jnp.int32)             # (S*B, 1)

    pred, loss = aspect_rs_fused(u_slab, i_slab, x_flat,
                                 params["gru_pack"], params["head_pack"], tgt)
    return pred.reshape(-1), loss[0, 0]


def init_params(key):
    ks = jax.random.split(key, 10)
    s = 0.1
    D, H, V = EMBED_DIM, HIDDEN, VOCAB

    # GRU weights stored gate-fused: W_ih (D, 3H), W_hh (H, 3H), gates (r,z,n)
    w_ih = s * jax.random.normal(ks[5], (D, 3 * H), jnp.float32)
    w_hh = s * jax.random.normal(ks[6], (H, 3 * H), jnp.float32)
    b_ih = s * jax.random.normal(ks[7], (1, 3 * H), jnp.float32)
    b_hh = s * jax.random.normal(ks[8], (1, 3 * H), jnp.float32)
    # fold the recurrent-side r/z biases into the input-side bias (legal for
    # r and z only; b_hn must stay inside the r*(...) term of the n gate)
    b_fold = jnp.concatenate([b_ih[:, :2 * H] + b_hh[:, :2 * H],
                              b_ih[:, 2 * H:]], axis=1)              # (1, 3H)
    b_hn_row = jnp.concatenate([b_hh[:, 2 * H:],
                                jnp.zeros((1, 2 * H), jnp.float32)], axis=1)
    gru_pack = jnp.concatenate([w_ih, w_hh, b_fold, b_hn_row], axis=0)

    # output projection for the (approximate) adaptive-softmax head,
    # lane-padded to VOCAB_PAD: zero pad weights, -1e30 pad bias -> padded
    # logits never win the max and contribute exactly 0 to the logsumexp.
    w_out = s * jax.random.normal(ks[9], (H, V), jnp.float32)
    b_out = jnp.zeros((1, V), jnp.float32)
    w_out_p = jnp.concatenate(
        [w_out, jnp.zeros((H, VOCAB_PAD - V), jnp.float32)], axis=1)
    b_out_p = jnp.concatenate(
        [b_out, jnp.full((1, VOCAB_PAD - V), -1e30, jnp.float32)], axis=1)
    head_pack = jnp.concatenate([w_out_p, b_out_p], axis=0)          # (H+1, Vpad)

    return {
        "user_aspect": s * jax.random.normal(ks[0], (NUM_USERS, D), jnp.float32),
        "item_aspect": s * jax.random.normal(ks[1], (NUM_ITEMS, D), jnp.float32),
        "user_free":   s * jax.random.normal(ks[2], (NUM_USERS, D), jnp.float32),
        "item_free":   s * jax.random.normal(ks[3], (NUM_ITEMS, D), jnp.float32),
        "word_emb":    s * jax.random.normal(ks[4], (VOCAB, D), jnp.float32),
        "gru_pack": gru_pack,
        "head_pack": head_pack,
    }


if __name__ == "__main__":
    key = jax.random.PRNGKey(0)
    pkey, ukey, ikey, rkey, okey, lkey = jax.random.split(key, 6)

    params = init_params(pkey)
    user = jax.random.randint(ukey, (BATCH,), 0, NUM_USERS, dtype=jnp.int32)
    item = jax.random.randint(ikey, (BATCH,), 0, NUM_ITEMS, dtype=jnp.int32)
    review_input = jax.random.randint(rkey, (SEQ_LEN, BATCH), 0, VOCAB,
                                      dtype=jnp.int32)
    review_output = jax.random.randint(okey, (SEQ_LEN, BATCH), 0, VOCAB,
                                       dtype=jnp.int32)
    label = jax.random.uniform(lkey, (BATCH,), jnp.float32, 1.0, 5.0)

    prediction, loss = jax.jit(aspect_rs_forward)(
        params, user, item, review_input, label, review_output)
    jax.block_until_ready((prediction, loss))

    assert prediction.shape == (BATCH,)
    assert loss.shape == ()
    assert bool(jnp.isfinite(loss)) and bool(jnp.all(jnp.isfinite(prediction)))
    print("KERNEL_OK")
</pallas_src>

<mosaic_0001>
module attributes {stable_mosaic.version = 11 : i64} {
  func.func @_fused_kernel(%arg0: memref<4x33xf32, #tpu.memory_space<vmem>>, %arg1: memref<4x32xf32, #tpu.memory_space<vmem>>, %arg2: memref<16x32xf32, #tpu.memory_space<vmem>>, %arg3: memref<66x96xf32, #tpu.memory_space<vmem>>, %arg4: memref<33x128xf32, #tpu.memory_space<vmem>>, %arg5: memref<16x1xi32, #tpu.memory_space<vmem>>, %arg6: memref<2x1xf32, #tpu.memory_space<vmem>>, %arg7: memref<1x1xf32, #tpu.memory_space<vmem>>) attributes {dimension_semantics = [], scalar_prefetch = 0 : i64, scratch_operands = 0 : i64, tpu.core_type = #tpu.core_type<tc>} {
    %c0 = arith.constant 0 : index
    %c0_0 = arith.constant 0 : index
    %0 = vector.load %arg0[%c0, %c0_0] : memref<4x33xf32, #tpu.memory_space<vmem>>, vector<4x32xf32>
    %c0_1 = arith.constant 0 : index
    %c32 = arith.constant 32 : index
    %1 = vector.load %arg0[%c0_1, %c32] : memref<4x33xf32, #tpu.memory_space<vmem>>, vector<2x1xf32>
    %c0_2 = arith.constant 0 : index
    %c0_3 = arith.constant 0 : index
    %2 = vector.load %arg1[%c0_2, %c0_3] : memref<4x32xf32, #tpu.memory_space<vmem>>, vector<4x32xf32>
    %3 = arith.mulf %0, %2 : vector<4x32xf32>
    %cst = arith.constant dense<0.000000e+00> : vector<4xf32>
    %4 = vector.multi_reduction <add>, %3, %cst [1] : vector<4x32xf32> to vector<4xf32>
    %5 = vector.shape_cast %4 : vector<4xf32> to vector<4x1xf32>
    %6 = vector.extract_strided_slice %5 {offsets = [0, 0], sizes = [2, 1], strides = [1, 1]} : vector<4x1xf32> to vector<2x1xf32>
    %7 = vector.extract_strided_slice %5 {offsets = [2, 0], sizes = [2, 1], strides = [1, 1]} : vector<4x1xf32> to vector<2x1xf32>
    %8 = arith.addf %6, %7 : vector<2x1xf32>
    %cst_4 = arith.constant 3.500000e+00 : f32
    %9 = vector.broadcast %cst_4 : f32 to vector<2x1xf32>
    %10 = arith.addf %8, %9 : vector<2x1xf32>
    %c0_5 = arith.constant 0 : index
    %c0_6 = arith.constant 0 : index
    %11 = vector.load %arg6[%c0_5, %c0_6] : memref<2x1xf32, #tpu.memory_space<vmem>>, vector<2x1xf32>
    tpu.vector_store %arg6[%c0_5, %c0_6], %10 {strides = array<i32>} : memref<2x1xf32, #tpu.memory_space<vmem>>, vector<2x1xf32>,
    %12 = arith.subf %10, %1 : vector<2x1xf32>
    %13 = arith.mulf %12, %12 : vector<2x1xf32>
    %14 = vector.shape_cast %13 : vector<2x1xf32> to vector<1x2x1xf32>
    %cst_7 = arith.constant dense<0.000000e+00> : vector<1xf32>
    %15 = vector.multi_reduction <add>, %14, %cst_7 [1, 2] : vector<1x2x1xf32> to vector<1xf32>
    %16 = vector.shape_cast %15 : vector<1xf32> to vector<1x1x1xf32>
    %17 = vector.extract %16[0, 0, 0] : f32 from vector<1x1x1xf32>
    %18 = vector.broadcast %17 : f32 to vector<1x1xf32>
    %cst_8 = arith.constant 5.000000e-01 : f32
    %19 = vector.broadcast %cst_8 : f32 to vector<1x1xf32>
    %20 = arith.mulf %18, %19 : vector<1x1xf32>
    %c0_9 = arith.constant 0 : index
    %c0_10 = arith.constant 0 : index
    %21 = vector.load %arg3[%c0_9, %c0_10] : memref<66x96xf32, #tpu.memory_space<vmem>>, vector<32x96xf32>
    %c32_11 = arith.constant 32 : index
    %c0_12 = arith.constant 0 : index
    %22 = vector.load %arg3[%c32_11, %c0_12] : memref<66x96xf32, #tpu.memory_space<vmem>>, vector<32x96xf32>
    %c64 = arith.constant 64 : index
    %c0_13 = arith.constant 0 : index
    %23 = vector.load %arg3[%c64, %c0_13] : memref<66x96xf32, #tpu.memory_space<vmem>>, vector<1x96xf32>
    %c65 = arith.constant 65 : index
    %c0_14 = arith.constant 0 : index
    %24 = vector.load %arg3[%c65, %c0_14] : memref<66x96xf32, #tpu.memory_space<vmem>>, vector<1x32xf32>
    %25 = vector.shape_cast %24 : vector<1x32xf32> to vector<1x32xf32>
    %26 = vector.broadcast %25 : vector<1x32xf32> to vector<2x32xf32>
    %c0_15 = arith.constant 0 : index
    %c0_16 = arith.constant 0 : index
    %27 = vector.load %arg2[%c0_15, %c0_16] : memref<16x32xf32, #tpu.memory_space<vmem>>, vector<16x32xf32>
    %cst_17 = arith.constant dense<0.000000e+00> : vector<16x96xf32>
    %28 = tpu.matmul %27, %21, %cst_17 {dimension_numbers = #tpu.dot_dimension_numbers<[1], [0], [0], [1], [0, 0, 1, 1], [], []>} : vector<16x32xf32>, vector<32x96xf32>, vector<16x96xf32> -> vector<16x96xf32>
    %29 = vector.broadcast %23 : vector<1x96xf32> to vector<16x96xf32>
    %30 = arith.addf %28, %29 : vector<16x96xf32>
    %cst_18 = arith.constant 0.000000e+00 : f32
    %31 = vector.broadcast %cst_18 : f32 to vector<2x32xf32>
    %32 = vector.extract_strided_slice %30 {offsets = [0, 0], sizes = [2, 96], strides = [1, 1]} : vector<16x96xf32> to vector<2x96xf32>
    %cst_19 = arith.constant dense<0.000000e+00> : vector<2x96xf32>
    %33 = tpu.matmul %31, %22, %cst_19 {dimension_numbers = #tpu.dot_dimension_numbers<[1], [0], [0], [1], [0, 0, 1, 1], [], []>} : vector<2x32xf32>, vector<32x96xf32>, vector<2x96xf32> -> vector<2x96xf32>
    %34 = vector.extract_strided_slice %32 {offsets = [0, 0], sizes = [2, 32], strides = [1, 1]} : vector<2x96xf32> to vector<2x32xf32>
    %35 = vector.extract_strided_slice %33 {offsets = [0, 0], sizes = [2, 32], strides = [1, 1]} : vector<2x96xf32> to vector<2x32xf32>
    %36 = arith.addf %34, %35 : vector<2x32xf32>
    %37 = vector.extract_strided_slice %32 {offsets = [0, 32], sizes = [2, 32], strides = [1, 1]} : vector<2x96xf32> to vector<2x32xf32>
    %38 = vector.extract_strided_slice %33 {offsets = [0, 32], sizes = [2, 32], strides = [1, 1]} : vector<2x96xf32> to vector<2x32xf32>
    %39 = arith.addf %37, %38 : vector<2x32xf32>
    %cst_20 = arith.constant 5.000000e-01 : f32
    %40 = vector.broadcast %cst_20 : f32 to vector<2x32xf32>
    %41 = arith.mulf %40, %36 : vector<2x32xf32>
    %42 = math.tanh %41 : vector<2x32xf32>
    %cst_21 = arith.constant 1.000000e+00 : f32
    %43 = vector.broadcast %cst_21 : f32 to vector<2x32xf32>
    %44 = arith.addf %42, %43 : vector<2x32xf32>
    %cst_22 = arith.constant 5.000000e-01 : f32
    %45 = vector.broadcast %cst_22 : f32 to vector<2x32xf32>
    %46 = arith.mulf %45, %44 : vector<2x32xf32>
    %cst_23 = arith.constant 5.000000e-01 : f32
    %47 = vector.broadcast %cst_23 : f32 to vector<2x32xf32>
    %48 = arith.mulf %47, %39 : vector<2x32xf32>
    %49 = math.tanh %48 : vector<2x32xf32>
    %cst_24 = arith.constant 1.000000e+00 : f32
    %50 = vector.broadcast %cst_24 : f32 to vector<2x32xf32>
    %51 = arith.addf %49, %50 : vector<2x32xf32>
    %cst_25 = arith.constant 5.000000e-01 : f32
    %52 = vector.broadcast %cst_25 : f32 to vector<2x32xf32>
    %53 = arith.mulf %52, %51 : vector<2x32xf32>
    %54 = vector.extract_strided_slice %32 {offsets = [0, 64], sizes = [2, 32], strides = [1, 1]} : vector<2x96xf32> to vector<2x32xf32>
    %55 = vector.extract_strided_slice %33 {offsets = [0, 64], sizes = [2, 32], strides = [1, 1]} : vector<2x96xf32> to vector<2x32xf32>
    %56 = arith.addf %55, %26 : vector<2x32xf32>
    %57 = arith.mulf %46, %56 : vector<2x32xf32>
    %58 = arith.addf %54, %57 : vector<2x32xf32>
    %59 = math.tanh %58 : vector<2x32xf32>
    %cst_26 = arith.constant 1.000000e+00 : f32
    %60 = vector.broadcast %cst_26 : f32 to vector<2x32xf32>
    %61 = arith.subf %60, %53 : vector<2x32xf32>
    %62 = arith.mulf %61, %59 : vector<2x32xf32>
    %63 = arith.mulf %53, %31 : vector<2x32xf32>
    %64 = arith.addf %62, %63 : vector<2x32xf32>
    %65 = vector.extract_strided_slice %30 {offsets = [2, 0], sizes = [2, 96], strides = [1, 1]} : vector<16x96xf32> to vector<2x96xf32>
    %cst_27 = arith.constant dense<0.000000e+00> : vector<2x96xf32>
    %66 = tpu.matmul %64, %22, %cst_27 {dimension_numbers = #tpu.dot_dimension_numbers<[1], [0], [0], [1], [0, 0, 1, 1], [], []>} : vector<2x32xf32>, vector<32x96xf32>, vector<2x96xf32> -> vector<2x96xf32>
    %67 = vector.extract_strided_slice %65 {offsets = [0, 0], sizes = [2, 32], strides = [1, 1]} : vector<2x96xf32> to vector<2x32xf32>
    %68 = vector.extract_strided_slice %66 {offsets = [0, 0], sizes = [2, 32], strides = [1, 1]} : vector<2x96xf32> to vector<2x32xf32>
    %69 = arith.addf %67, %68 : vector<2x32xf32>
    %70 = vector.extract_strided_slice %65 {offsets = [0, 32], sizes = [2, 32], strides = [1, 1]} : vector<2x96xf32> to vector<2x32xf32>
    %71 = vector.extract_strided_slice %66 {offsets = [0, 32], sizes = [2, 32], strides = [1, 1]} : vector<2x96xf32> to vector<2x32xf32>
    %72 = arith.addf %70, %71 : vector<2x32xf32>
    %cst_28 = arith.constant 5.000000e-01 : f32
    %73 = vector.broadcast %cst_28 : f32 to vector<2x32xf32>
    %74 = arith.mulf %73, %69 : vector<2x32xf32>
    %75 = math.tanh %74 : vector<2x32xf32>
    %cst_29 = arith.constant 1.000000e+00 : f32
    %76 = vector.broadcast %cst_29 : f32 to vector<2x32xf32>
    %77 = arith.addf %75, %76 : vector<2x32xf32>
    %cst_30 = arith.constant 5.000000e-01 : f32
    %78 = vector.broadcast %cst_30 : f32 to vector<2x32xf32>
    %79 = arith.mulf %78, %77 : vector<2x32xf32>
    %cst_31 = arith.constant 5.000000e-01 : f32
    %80 = vector.broadcast %cst_31 : f32 to vector<2x32xf32>
    %81 = arith.mulf %80, %72 : vector<2x32xf32>
    %82 = math.tanh %81 : vector<2x32xf32>
    %cst_32 = arith.constant 1.000000e+00 : f32
    %83 = vector.broadcast %cst_32 : f32 to vector<2x32xf32>
    %84 = arith.addf %82, %83 : vector<2x32xf32>
    %cst_33 = arith.constant 5.000000e-01 : f32
    %85 = vector.broadcast %cst_33 : f32 to vector<2x32xf32>
    %86 = arith.mulf %85, %84 : vector<2x32xf32>
    %87 = vector.extract_strided_slice %65 {offsets = [0, 64], sizes = [2, 32], strides = [1, 1]} : vector<2x96xf32> to vector<2x32xf32>
    %88 = vector.extract_strided_slice %66 {offsets = [0, 64], sizes = [2, 32], strides = [1, 1]} : vector<2x96xf32> to vector<2x32xf32>
    %89 = arith.addf %88, %26 : vector<2x32xf32>
    %90 = arith.mulf %79, %89 : vector<2x32xf32>
    %91 = arith.addf %87, %90 : vector<2x32xf32>
    %92 = math.tanh %91 : vector<2x32xf32>
    %cst_34 = arith.constant 1.000000e+00 : f32
    %93 = vector.broadcast %cst_34 : f32 to vector<2x32xf32>
    %94 = arith.subf %93, %86 : vector<2x32xf32>
    %95 = arith.mulf %94, %92 : vector<2x32xf32>
    %96 = arith.mulf %86, %64 : vector<2x32xf32>
    %97 = arith.addf %95, %96 : vector<2x32xf32>
    %98 = vector.extract_strided_slice %30 {offsets = [4, 0], sizes = [2, 96], strides = [1, 1]} : vector<16x96xf32> to vector<2x96xf32>
    %cst_35 = arith.constant dense<0.000000e+00> : vector<2x96xf32>
    %99 = tpu.matmul %97, %22, %cst_35 {dimension_numbers = #tpu.dot_dimension_numbers<[1], [0], [0], [1], [0, 0, 1, 1], [], []>} : vector<2x32xf32>, vector<32x96xf32>, vector<2x96xf32> -> vector<2x96xf32>
    %100 = vector.extract_strided_slice %98 {offsets = [0, 0], sizes = [2, 32], strides = [1, 1]} : vector<2x96xf32> to vector<2x32xf32>
    %101 = vector.extract_strided_slice %99 {offsets = [0, 0], sizes = [2, 32], strides = [1, 1]} : vector<2x96xf32> to vector<2x32xf32>
    %102 = arith.addf %100, %101 : vector<2x32xf32>
    %103 = vector.extract_strided_slice %98 {offsets = [0, 32], sizes = [2, 32], strides = [1, 1]} : vector<2x96xf32> to vector<2x32xf32>
    %104 = vector.extract_strided_slice %99 {offsets = [0, 32], sizes = [2, 32], strides = [1, 1]} : vector<2x96xf32> to vector<2x32xf32>
    %105 = arith.addf %103, %104 : vector<2x32xf32>
    %cst_36 = arith.constant 5.000000e-01 : f32
    %106 = vector.broadcast %cst_36 : f32 to vector<2x32xf32>
    %107 = arith.mulf %106, %102 : vector<2x32xf32>
    %108 = math.tanh %107 : vector<2x32xf32>
    %cst_37 = arith.constant 1.000000e+00 : f32
    %109 = vector.broadcast %cst_37 : f32 to vector<2x32xf32>
    %110 = arith.addf %108, %109 : vector<2x32xf32>
    %cst_38 = arith.constant 5.000000e-01 : f32
    %111 = vector.broadcast %cst_38 : f32 to vector<2x32xf32>
    %112 = arith.mulf %111, %110 : vector<2x32xf32>
    %cst_39 = arith.constant 5.000000e-01 : f32
    %113 = vector.broadcast %cst_39 : f32 to vector<2x32xf32>
    %114 = arith.mulf %113, %105 : vector<2x32xf32>
    %115 = math.tanh %114 : vector<2x32xf32>
    %cst_40 = arith.constant 1.000000e+00 : f32
    %116 = vector.broadcast %cst_40 : f32 to vector<2x32xf32>
    %117 = arith.addf %115, %116 : vector<2x32xf32>
    %cst_41 = arith.constant 5.000000e-01 : f32
    %118 = vector.broadcast %cst_41 : f32 to vector<2x32xf32>
    %119 = arith.mulf %118, %117 : vector<2x32xf32>
    %120 = vector.extract_strided_slice %98 {offsets = [0, 64], sizes = [2, 32], strides = [1, 1]} : vector<2x96xf32> to vector<2x32xf32>
    %121 = vector.extract_strided_slice %99 {offsets = [0, 64], sizes = [2, 32], strides = [1, 1]} : vector<2x96xf32> to vector<2x32xf32>
    %122 = arith.addf %121, %26 : vector<2x32xf32>
    %123 = arith.mulf %112, %122 : vector<2x32xf32>
    %124 = arith.addf %120, %123 : vector<2x32xf32>
    %125 = math.tanh %124 : vector<2x32xf32>
    %cst_42 = arith.constant 1.000000e+00 : f32
    %126 = vector.broadcast %cst_42 : f32 to vector<2x32xf32>
    %127 = arith.subf %126, %119 : vector<2x32xf32>
    %128 = arith.mulf %127, %125 : vector<2x32xf32>
    %129 = arith.mulf %119, %97 : vector<2x32xf32>
    %130 = arith.addf %128, %129 : vector<2x32xf32>
    %131 = vector.extract_strided_slice %30 {offsets = [6, 0], sizes = [2, 96], strides = [1, 1]} : vector<16x96xf32> to vector<2x96xf32>
    %cst_43 = arith.constant dense<0.000000e+00> : vector<2x96xf32>
    %132 = tpu.matmul %130, %22, %cst_43 {dimension_numbers = #tpu.dot_dimension_numbers<[1], [0], [0], [1], [0, 0, 1, 1], [], []>} : vector<2x32xf32>, vector<32x96xf32>, vector<2x96xf32> -> vector<2x96xf32>
    %133 = vector.extract_strided_slice %131 {offsets = [0, 0], sizes = [2, 32], strides = [1, 1]} : vector<2x96xf32> to vector<2x32xf32>
    %134 = vector.extract_strided_slice %132 {offsets = [0, 0], sizes = [2, 32], strides = [1, 1]} : vector<2x96xf32> to vector<2x32xf32>
    %135 = arith.addf %133, %134 : vector<2x32xf32>
    %136 = vector.extract_strided_slice %131 {offsets = [0, 32], sizes = [2, 32], strides = [1, 1]} : vector<2x96xf32> to vector<2x32xf32>
    %137 = vector.extract_strided_slice %132 {offsets = [0, 32], sizes = [2, 32], strides = [1, 1]} : vector<2x96xf32> to vector<2x32xf32>
    %138 = arith.addf %136, %137 : vector<2x32xf32>
    %cst_44 = arith.constant 5.000000e-01 : f32
    %139 = vector.broadcast %cst_44 : f32 to vector<2x32xf32>
    %140 = arith.mulf %139, %135 : vector<2x32xf32>
    %141 = math.tanh %140 : vector<2x32xf32>
    %cst_45 = arith.constant 1.000000e+00 : f32
    %142 = vector.broadcast %cst_45 : f32 to vector<2x32xf32>
    %143 = arith.addf %141, %142 : vector<2x32xf32>
    %cst_46 = arith.constant 5.000000e-01 : f32
    %144 = vector.broadcast %cst_46 : f32 to vector<2x32xf32>
    %145 = arith.mulf %144, %143 : vector<2x32xf32>
    %cst_47 = arith.constant 5.000000e-01 : f32
    %146 = vector.broadcast %cst_47 : f32 to vector<2x32xf32>
    %147 = arith.mulf %146, %138 : vector<2x32xf32>
    %148 = math.tanh %147 : vector<2x32xf32>
    %cst_48 = arith.constant 1.000000e+00 : f32
    %149 = vector.broadcast %cst_48 : f32 to vector<2x32xf32>
    %150 = arith.addf %148, %149 : vector<2x32xf32>
    %cst_49 = arith.constant 5.000000e-01 : f32
    %151 = vector.broadcast %cst_49 : f32 to vector<2x32xf32>
    %152 = arith.mulf %151, %150 : vector<2x32xf32>
    %153 = vector.extract_strided_slice %131 {offsets = [0, 64], sizes = [2, 32], strides = [1, 1]} : vector<2x96xf32> to vector<2x32xf32>
    %154 = vector.extract_strided_slice %132 {offsets = [0, 64], sizes = [2, 32], strides = [1, 1]} : vector<2x96xf32> to vector<2x32xf32>
    %155 = arith.addf %154, %26 : vector<2x32xf32>
    %156 = arith.mulf %145, %155 : vector<2x32xf32>
    %157 = arith.addf %153, %156 : vector<2x32xf32>
    %158 = math.tanh %157 : vector<2x32xf32>
    %cst_50 = arith.constant 1.000000e+00 : f32
    %159 = vector.broadcast %cst_50 : f32 to vector<2x32xf32>
    %160 = arith.subf %159, %152 : vector<2x32xf32>
    %161 = arith.mulf %160, %158 : vector<2x32xf32>
    %162 = arith.mulf %152, %130 : vector<2x32xf32>
    %163 = arith.addf %161, %162 : vector<2x32xf32>
    %164 = vector.extract_strided_slice %30 {offsets = [8, 0], sizes = [2, 96], strides = [1, 1]} : vector<16x96xf32> to vector<2x96xf32>
    %cst_51 = arith.constant dense<0.000000e+00> : vector<2x96xf32>
    %165 = tpu.matmul %163, %22, %cst_51 {dimension_numbers = #tpu.dot_dimension_numbers<[1], [0], [0], [1], [0, 0, 1, 1], [], []>} : vector<2x32xf32>, vector<32x96xf32>, vector<2x96xf32> -> vector<2x96xf32>
    %166 = vector.extract_strided_slice %164 {offsets = [0, 0], sizes = [2, 32], strides = [1, 1]} : vector<2x96xf32> to vector<2x32xf32>
    %167 = vector.extract_strided_slice %165 {offsets = [0, 0], sizes = [2, 32], strides = [1, 1]} : vector<2x96xf32> to vector<2x32xf32>
    %168 = arith.addf %166, %167 : vector<2x32xf32>
    %169 = vector.extract_strided_slice %164 {offsets = [0, 32], sizes = [2, 32], strides = [1, 1]} : vector<2x96xf32> to vector<2x32xf32>
    %170 = vector.extract_strided_slice %165 {offsets = [0, 32], sizes = [2, 32], strides = [1, 1]} : vector<2x96xf32> to vector<2x32xf32>
    %171 = arith.addf %169, %170 : vector<2x32xf32>
    %cst_52 = arith.constant 5.000000e-01 : f32
    %172 = vector.broadcast %cst_52 : f32 to vector<2x32xf32>
    %173 = arith.mulf %172, %168 : vector<2x32xf32>
    %174 = math.tanh %173 : vector<2x32xf32>
    %cst_53 = arith.constant 1.000000e+00 : f32
    %175 = vector.broadcast %cst_53 : f32 to vector<2x32xf32>
    %176 = arith.addf %174, %175 : vector<2x32xf32>
    %cst_54 = arith.constant 5.000000e-01 : f32
    %177 = vector.broadcast %cst_54 : f32 to vector<2x32xf32>
    %178 = arith.mulf %177, %176 : vector<2x32xf32>
    %cst_55 = arith.constant 5.000000e-01 : f32
    %179 = vector.broadcast %cst_55 : f32 to vector<2x32xf32>
    %180 = arith.mulf %179, %171 : vector<2x32xf32>
    %181 = math.tanh %180 : vector<2x32xf32>
    %cst_56 = arith.constant 1.000000e+00 : f32
    %182 = vector.broadcast %cst_56 : f32 to vector<2x32xf32>
    %183 = arith.addf %181, %182 : vector<2x32xf32>
    %cst_57 = arith.constant 5.000000e-01 : f32
    %184 = vector.broadcast %cst_57 : f32 to vector<2x32xf32>
    %185 = arith.mulf %184, %183 : vector<2x32xf32>
    %186 = vector.extract_strided_slice %164 {offsets = [0, 64], sizes = [2, 32], strides = [1, 1]} : vector<2x96xf32> to vector<2x32xf32>
    %187 = vector.extract_strided_slice %165 {offsets = [0, 64], sizes = [2, 32], strides = [1, 1]} : vector<2x96xf32> to vector<2x32xf32>
    %188 = arith.addf %187, %26 : vector<2x32xf32>
    %189 = arith.mulf %178, %188 : vector<2x32xf32>
    %190 = arith.addf %186, %189 : vector<2x32xf32>
    %191 = math.tanh %190 : vector<2x32xf32>
    %cst_58 = arith.constant 1.000000e+00 : f32
    %192 = vector.broadcast %cst_58 : f32 to vector<2x32xf32>
    %193 = arith.subf %192, %185 : vector<2x32xf32>
    %194 = arith.mulf %193, %191 : vector<2x32xf32>
    %195 = arith.mulf %185, %163 : vector<2x32xf32>
    %196 = arith.addf %194, %195 : vector<2x32xf32>
    %197 = vector.extract_strided_slice %30 {offsets = [10, 0], sizes = [2, 96], strides = [1, 1]} : vector<16x96xf32> to vector<2x96xf32>
    %cst_59 = arith.constant dense<0.000000e+00> : vector<2x96xf32>
    %198 = tpu.matmul %196, %22, %cst_59 {dimension_numbers = #tpu.dot_dimension_numbers<[1], [0], [0], [1], [0, 0, 1, 1], [], []>} : vector<2x32xf32>, vector<32x96xf32>, vector<2x96xf32> -> vector<2x96xf32>
    %199 = vector.extract_strided_slice %197 {offsets = [0, 0], sizes = [2, 32], strides = [1, 1]} : vector<2x96xf32> to vector<2x32xf32>
    %200 = vector.extract_strided_slice %198 {offsets = [0, 0], sizes = [2, 32], strides = [1, 1]} : vector<2x96xf32> to vector<2x32xf32>
    %201 = arith.addf %199, %200 : vector<2x32xf32>
    %202 = vector.extract_strided_slice %197 {offsets = [0, 32], sizes = [2, 32], strides = [1, 1]} : vector<2x96xf32> to vector<2x32xf32>
    %203 = vector.extract_strided_slice %198 {offsets = [0, 32], sizes = [2, 32], strides = [1, 1]} : vector<2x96xf32> to vector<2x32xf32>
    %204 = arith.addf %202, %203 : vector<2x32xf32>
    %cst_60 = arith.constant 5.000000e-01 : f32
    %205 = vector.broadcast %cst_60 : f32 to vector<2x32xf32>
    %206 = arith.mulf %205, %201 : vector<2x32xf32>
    %207 = math.tanh %206 : vector<2x32xf32>
    %cst_61 = arith.constant 1.000000e+00 : f32
    %208 = vector.broadcast %cst_61 : f32 to vector<2x32xf32>
    %209 = arith.addf %207, %208 : vector<2x32xf32>
    %cst_62 = arith.constant 5.000000e-01 : f32
    %210 = vector.broadcast %cst_62 : f32 to vector<2x32xf32>
    %211 = arith.mulf %210, %209 : vector<2x32xf32>
    %cst_63 = arith.constant 5.000000e-01 : f32
    %212 = vector.broadcast %cst_63 : f32 to vector<2x32xf32>
    %213 = arith.mulf %212, %204 : vector<2x32xf32>
    %214 = math.tanh %213 : vector<2x32xf32>
    %cst_64 = arith.constant 1.000000e+00 : f32
    %215 = vector.broadcast %cst_64 : f32 to vector<2x32xf32>
    %216 = arith.addf %214, %215 : vector<2x32xf32>
    %cst_65 = arith.constant 5.000000e-01 : f32
    %217 = vector.broadcast %cst_65 : f32 to vector<2x32xf32>
    %218 = arith.mulf %217, %216 : vector<2x32xf32>
    %219 = vector.extract_strided_slice %197 {offsets = [0, 64], sizes = [2, 32], strides = [1, 1]} : vector<2x96xf32> to vector<2x32xf32>
    %220 = vector.extract_strided_slice %198 {offsets = [0, 64], sizes = [2, 32], strides = [1, 1]} : vector<2x96xf32> to vector<2x32xf32>
    %221 = arith.addf %220, %26 : vector<2x32xf32>
    %222 = arith.mulf %211, %221 : vector<2x32xf32>
    %223 = arith.addf %219, %222 : vector<2x32xf32>
    %224 = math.tanh %223 : vector<2x32xf32>
    %cst_66 = arith.constant 1.000000e+00 : f32
    %225 = vector.broadcast %cst_66 : f32 to vector<2x32xf32>
    %226 = arith.subf %225, %218 : vector<2x32xf32>
    %227 = arith.mulf %226, %224 : vector<2x32xf32>
    %228 = arith.mulf %218, %196 : vector<2x32xf32>
    %229 = arith.addf %227, %228 : vector<2x32xf32>
    %230 = vector.extract_strided_slice %30 {offsets = [12, 0], sizes = [2, 96], strides = [1, 1]} : vector<16x96xf32> to vector<2x96xf32>
    %cst_67 = arith.constant dense<0.000000e+00> : vector<2x96xf32>
    %231 = tpu.matmul %229, %22, %cst_67 {dimension_numbers = #tpu.dot_dimension_numbers<[1], [0], [0], [1], [0, 0, 1, 1], [], []>} : vector<2x32xf32>, vector<32x96xf32>, vector<2x96xf32> -> vector<2x96xf32>
    %232 = vector.extract_strided_slice %230 {offsets = [0, 0], sizes = [2, 32], strides = [1, 1]} : vector<2x96xf32> to vector<2x32xf32>
    %233 = vector.extract_strided_slice %231 {offsets = [0, 0], sizes = [2, 32], strides = [1, 1]} : vector<2x96xf32> to vector<2x32xf32>
    %234 = arith.addf %232, %233 : vector<2x32xf32>
    %235 = vector.extract_strided_slice %230 {offsets = [0, 32], sizes = [2, 32], strides = [1, 1]} : vector<2x96xf32> to vector<2x32xf32>
    %236 = vector.extract_strided_slice %231 {offsets = [0, 32], sizes = [2, 32], strides = [1, 1]} : vector<2x96xf32> to vector<2x32xf32>
    %237 = arith.addf %235, %236 : vector<2x32xf32>
    %cst_68 = arith.constant 5.000000e-01 : f32
    %238 = vector.broadcast %cst_68 : f32 to vector<2x32xf32>
    %239 = arith.mulf %238, %234 : vector<2x32xf32>
    %240 = math.tanh %239 : vector<2x32xf32>
    %cst_69 = arith.constant 1.000000e+00 : f32
    %241 = vector.broadcast %cst_69 : f32 to vector<2x32xf32>
    %242 = arith.addf %240, %241 : vector<2x32xf32>
    %cst_70 = arith.constant 5.000000e-01 : f32
    %243 = vector.broadcast %cst_70 : f32 to vector<2x32xf32>
    %244 = arith.mulf %243, %242 : vector<2x32xf32>
    %cst_71 = arith.constant 5.000000e-01 : f32
    %245 = vector.broadcast %cst_71 : f32 to vector<2x32xf32>
    %246 = arith.mulf %245, %237 : vector<2x32xf32>
    %247 = math.tanh %246 : vector<2x32xf32>
    %cst_72 = arith.constant 1.000000e+00 : f32
    %248 = vector.broadcast %cst_72 : f32 to vector<2x32xf32>
    %249 = arith.addf %247, %248 : vector<2x32xf32>
    %cst_73 = arith.constant 5.000000e-01 : f32
    %250 = vector.broadcast %cst_73 : f32 to vector<2x32xf32>
    %251 = arith.mulf %250, %249 : vector<2x32xf32>
    %252 = vector.extract_strided_slice %230 {offsets = [0, 64], sizes = [2, 32], strides = [1, 1]} : vector<2x96xf32> to vector<2x32xf32>
    %253 = vector.extract_strided_slice %231 {offsets = [0, 64], sizes = [2, 32], strides = [1, 1]} : vector<2x96xf32> to vector<2x32xf32>
    %254 = arith.addf %253, %26 : vector<2x32xf32>
    %255 = arith.mulf %244, %254 : vector<2x32xf32>
    %256 = arith.addf %252, %255 : vector<2x32xf32>
    %257 = math.tanh %256 : vector<2x32xf32>
    %cst_74 = arith.constant 1.000000e+00 : f32
    %258 = vector.broadcast %cst_74 : f32 to vector<2x32xf32>
    %259 = arith.subf %258, %251 : vector<2x32xf32>
    %260 = arith.mulf %259, %257 : vector<2x32xf32>
    %261 = arith.mulf %251, %229 : vector<2x32xf32>
    %262 = arith.addf %260, %261 : vector<2x32xf32>
    %263 = vector.extract_strided_slice %30 {offsets = [14, 0], sizes = [2, 96], strides = [1, 1]} : vector<16x96xf32> to vector<2x96xf32>
    %cst_75 = arith.constant dense<0.000000e+00> : vector<2x96xf32>
    %264 = tpu.matmul %262, %22, %cst_75 {dimension_numbers = #tpu.dot_dimension_numbers<[1], [0], [0], [1], [0, 0, 1, 1], [], []>} : vector<2x32xf32>, vector<32x96xf32>, vector<2x96xf32> -> vector<2x96xf32>
    %265 = vector.extract_strided_slice %263 {offsets = [0, 0], sizes = [2, 32], strides = [1, 1]} : vector<2x96xf32> to vector<2x32xf32>
    %266 = vector.extract_strided_slice %264 {offsets = [0, 0], sizes = [2, 32], strides = [1, 1]} : vector<2x96xf32> to vector<2x32xf32>
    %267 = arith.addf %265, %266 : vector<2x32xf32>
    %268 = vector.extract_strided_slice %263 {offsets = [0, 32], sizes = [2, 32], strides = [1, 1]} : vector<2x96xf32> to vector<2x32xf32>
    %269 = vector.extract_strided_slice %264 {offsets = [0, 32], sizes = [2, 32], strides = [1, 1]} : vector<2x96xf32> to vector<2x32xf32>
    %270 = arith.addf %268, %269 : vector<2x32xf32>
    %cst_76 = arith.constant 5.000000e-01 : f32
    %271 = vector.broadcast %cst_76 : f32 to vector<2x32xf32>
    %272 = arith.mulf %271, %267 : vector<2x32xf32>
    %273 = math.tanh %272 : vector<2x32xf32>
    %cst_77 = arith.constant 1.000000e+00 : f32
    %274 = vector.broadcast %cst_77 : f32 to vector<2x32xf32>
    %275 = arith.addf %273, %274 : vector<2x32xf32>
    %cst_78 = arith.constant 5.000000e-01 : f32
    %276 = vector.broadcast %cst_78 : f32 to vector<2x32xf32>
    %277 = arith.mulf %276, %275 : vector<2x32xf32>
    %cst_79 = arith.constant 5.000000e-01 : f32
    %278 = vector.broadcast %cst_79 : f32 to vector<2x32xf32>
    %279 = arith.mulf %278, %270 : vector<2x32xf32>
    %280 = math.tanh %279 : vector<2x32xf32>
    %cst_80 = arith.constant 1.000000e+00 : f32
    %281 = vector.broadcast %cst_80 : f32 to vector<2x32xf32>
    %282 = arith.addf %280, %281 : vector<2x32xf32>
    %cst_81 = arith.constant 5.000000e-01 : f32
    %283 = vector.broadcast %cst_81 : f32 to vector<2x32xf32>
    %284 = arith.mulf %283, %282 : vector<2x32xf32>
    %285 = vector.extract_strided_slice %263 {offsets = [0, 64], sizes = [2, 32], strides = [1, 1]} : vector<2x96xf32> to vector<2x32xf32>
    %286 = vector.extract_strided_slice %264 {offsets = [0, 64], sizes = [2, 32], strides = [1, 1]} : vector<2x96xf32> to vector<2x32xf32>
    %287 = arith.addf %286, %26 : vector<2x32xf32>
    %288 = arith.mulf %277, %287 : vector<2x32xf32>
    %289 = arith.addf %285, %288 : vector<2x32xf32>
    %290 = math.tanh %289 : vector<2x32xf32>
    %cst_82 = arith.constant 1.000000e+00 : f32
    %291 = vector.broadcast %cst_82 : f32 to vector<2x32xf32>
    %292 = arith.subf %291, %284 : vector<2x32xf32>
    %293 = arith.mulf %292, %290 : vector<2x32xf32>
    %294 = arith.mulf %284, %262 : vector<2x32xf32>
    %295 = arith.addf %293, %294 : vector<2x32xf32>
    %296 = tpu.concatenate %64, %97, %130, %163, %196, %229, %262, %295 in 0 : vector<2x32xf32>, vector<2x32xf32>, vector<2x32xf32>, vector<2x32xf32>, vector<2x32xf32>, vector<2x32xf32>, vector<2x32xf32>, vector<2x32xf32> -> vector<16x32xf32>
    %c0_83 = arith.constant 0 : index
    %c0_84 = arith.constant 0 : index
    %297 = vector.load %arg4[%c0_83, %c0_84] : memref<33x128xf32, #tpu.memory_space<vmem>>, vector<32x128xf32>
    %c32_85 = arith.constant 32 : index
    %c0_86 = arith.constant 0 : index
    %298 = vector.load %arg4[%c32_85, %c0_86] : memref<33x128xf32, #tpu.memory_space<vmem>>, vector<1x128xf32>
    %cst_87 = arith.constant dense<0.000000e+00> : vector<16x128xf32>
    %299 = tpu.matmul %296, %297, %cst_87 {dimension_numbers = #tpu.dot_dimension_numbers<[1], [0], [0], [1], [0, 0, 1, 1], [], []>} : vector<16x32xf32>, vector<32x128xf32>, vector<16x128xf32> -> vector<16x128xf32>
    %300 = vector.broadcast %298 : vector<1x128xf32> to vector<16x128xf32>
    %301 = arith.addf %299, %300 : vector<16x128xf32>
    %cst_88 = arith.constant dense<0xFF800000> : vector<16xf32>
    %302 = vector.multi_reduction <maximumf>, %301, %cst_88 [1] : vector<16x128xf32> to vector<16xf32>
    %303 = vector.shape_cast %302 : vector<16xf32> to vector<16x1xf32>
    %304 = vector.broadcast %303 : vector<16x1xf32> to vector<16x128xf32>
    %305 = arith.subf %301, %304 : vector<16x128xf32>
    %306 = math.exp %305 : vector<16x128xf32>
    %cst_89 = arith.constant dense<0.000000e+00> : vector<16xf32>
    %307 = vector.multi_reduction <add>, %306, %cst_89 [1] : vector<16x128xf32> to vector<16xf32>
    %308 = vector.shape_cast %307 : vector<16xf32> to vector<16x1xf32>
    %309 = math.log %308 : vector<16x1xf32>
    %310 = arith.addf %303, %309 : vector<16x1xf32>
    %311 = tpu.iota {dimensions = array<i32: 1>} : vector<16x128xi32>
    %c0_90 = arith.constant 0 : index
    %c0_91 = arith.constant 0 : index
    %312 = vector.load %arg5[%c0_90, %c0_91] : memref<16x1xi32, #tpu.memory_space<vmem>>, vector<16x1xi32>
    %313 = vector.broadcast %312 : vector<16x1xi32> to vector<16x128xi32>
    %314 = arith.cmpi eq, %311, %313 : vector<16x128xi32>
    %cst_92 = arith.constant 0.000000e+00 : f32
    %315 = vector.broadcast %cst_92 : f32 to vector<16x128xf32>
    %316 = arith.select %314, %301, %315 : vector<16x128xi1>, vector<16x128xf32>
    %cst_93 = arith.constant dense<0.000000e+00> : vector<16xf32>
    %317 = vector.multi_reduction <add>, %316, %cst_93 [1] : vector<16x128xf32> to vector<16xf32>
    %318 = vector.shape_cast %317 : vector<16xf32> to vector<16x1xf32>
    %319 = arith.subf %310, %318 : vector<16x1xf32>
    %320 = vector.shape_cast %319 : vector<16x1xf32> to vector<1x16x1xf32>
    %cst_94 = arith.constant dense<0.000000e+00> : vector<1xf32>
    %321 = vector.multi_reduction <add>, %320, %cst_94 [1, 2] : vector<1x16x1xf32> to vector<1xf32>
    %322 = vector.shape_cast %321 : vector<1xf32> to vector<1x1x1xf32>
    %323 = vector.extract %322[0, 0, 0] : f32 from vector<1x1x1xf32>
    %324 = vector.broadcast %323 : f32 to vector<1x1xf32>
    %cst_95 = arith.constant 6.250000e-02 : f32
    %325 = vector.broadcast %cst_95 : f32 to vector<1x1xf32>
    %326 = arith.mulf %324, %325 : vector<1x1xf32>
    %327 = arith.addf %20, %326 : vector<1x1xf32>
    %c0_96 = arith.constant 0 : index
    %c0_97 = arith.constant 0 : index
    %328 = vector.load %arg7[%c0_96, %c0_97] : memref<1x1xf32, #tpu.memory_space<vmem>>, vector<1x1xf32>
    tpu.vector_store %arg7[%c0_96, %c0_97], %327 {strides = array<i32>} : memref<1x1xf32, #tpu.memory_space<vmem>>, vector<1x1xf32>,
    return
  }
}

</mosaic_0001>

<llo_original>
// kernel: aspect_rs_forward.1
$region0: #{aspect_rs_forward.1}
  #allocation0 [shape = 'u32[]', space=smem, size = 0x4, offset = 0x4, fixed_abs, tag = 'smem constant byte address 0x4 - core index']
  #allocation1 [shape = 'u32[144,128]{1,0:T(1,128)}', space=vmem, size = 0x12000, scoped, tag = 'internal scratch']
  %s0 = inlined_call_operand.vmem [shape: f32[4,33], index: 0, kind: input, shape index: {}]
  %s1 = inlined_call_operand.vmem [shape: f32[4,32], index: 1, kind: input, shape index: {}]
  %s2 = inlined_call_operand.vmem [shape: f32[16,32], index: 2, kind: input, shape index: {}]
  %s3 = inlined_call_operand.vmem [shape: f32[66,96], index: 3, kind: input, shape index: {}]
  %s4 = inlined_call_operand.vmem [shape: f32[33,128], index: 4, kind: input, shape index: {}]
  %s5 = inlined_call_operand.vmem [shape: s32[16,1], index: 5, kind: input, shape index: {}]
  %s6 = inlined_call_operand.vmem [shape: f32[2,1], index: 6, kind: output, shape index: {0}]
  %s7 = inlined_call_operand.hbm [shape: f32[1,1], index: 7, kind: output, shape index: {1}]
  %8 = xla_tuple %s6, %s7
  %s9 = sld [smem:[#allocation0]]
  $region42: #{aspect_rs_forward.1} parent=0
    _
  %s11 = ssub.s32 1, %s9
  %s12 = scalar_select 0, %s11, %s9
  $region1: #{aspect_rs_forward.1} parent=0
    #allocation2 [shape = 'u8[512]{0}', space=vmem, size = 0x400, scoped, tag = 'output window, operand 1, single buffered']
    #allocation3 [shape = 's32[1]{0}', space=sflag, size = 0x4, scoped, tag = 'scoped memory for aspect_rs_forward.1']
    %13 = vsyncpa [#allocation3], 0
    // Predicated region
    $region2: #{aspect_rs_forward.1} parent=1 // pred_check
      _
    $region3: #{aspect_rs_forward.1} parent=1 // pred_check_branch
      %15 = sbr.rel (0) target = $region5
    $region4: #{aspect_rs_forward.1} parent=1 // pred_region
      _
    $region5: #{aspect_rs_forward.1} parent=1 // pred_fallthru
      _
    // Predicated region
    $region6: #{aspect_rs_forward.1} parent=1 // pred_check
      _
    $region7: #{aspect_rs_forward.1} parent=1 // pred_check_branch
      %17 = sbr.rel (0) target = $region9
    $region8: #{aspect_rs_forward.1} parent=1 // pred_region
      _
    $region9: #{aspect_rs_forward.1} parent=1 // pred_fallthru
      _
    // Predicated region
    $region10: #{aspect_rs_forward.1} parent=1 // pred_check
      _
    $region11: #{aspect_rs_forward.1} parent=1 // pred_check_branch
      %19 = sbr.rel (0) target = $region13
    $region12: #{aspect_rs_forward.1} parent=1 // pred_region
      _
    $region13: #{aspect_rs_forward.1} parent=1 // pred_fallthru
      _
    // Predicated region
    $region14: #{aspect_rs_forward.1} parent=1 // pred_check
      _
    $region15: #{aspect_rs_forward.1} parent=1 // pred_check_branch
      %21 = sbr.rel (0) target = $region17
    $region16: #{aspect_rs_forward.1} parent=1 // pred_region
      _
    $region17: #{aspect_rs_forward.1} parent=1 // pred_fallthru
      _
    // Predicated region
    $region18: #{aspect_rs_forward.1} parent=1 // pred_check
      _
    $region19: #{aspect_rs_forward.1} parent=1 // pred_check_branch
      %23 = sbr.rel (0) target = $region21
    $region20: #{aspect_rs_forward.1} parent=1 // pred_region
      _
    $region21: #{aspect_rs_forward.1} parent=1 // pred_fallthru
      _
    // Predicated region
    $region22: #{aspect_rs_forward.1} parent=1 // pred_check
      _
    $region23: #{aspect_rs_forward.1} parent=1 // pred_check_branch
      %25 = sbr.rel (0) target = $region25
    $region24: #{aspect_rs_forward.1} parent=1 // pred_region
      _
    $region25: #{aspect_rs_forward.1} parent=1 // pred_fallthru
      _
    %v26 = vld [vmem:[%s0] sm:$0xf]
    %v27 = vld [vmem:[%s0] sm:$0x3]
    %v28 = vld [vmem:[%s1] sm:$0xf]
    %v29 = vmul.f32 %v26, %v28
    %vm30 = vcmask 257024
    %v31 = vsel %vm30, %v29, 0.0
    %32 = vadd.xlane.f32.xlu0 %v31
    %v33 = vpop.xlane.xlu0 %32
    %v35 = vrot.slane %v33, 2
    %v37 = vadd.f32 %v33, %v35
    %v38 = vadd.f32 %v37, 3.5
    %vm39 = vcmask 1024
    %40 = vst.msk [vmem:[%s6] sm:$0x3] %vm39, %v38
    %42 = vrot.lane.b32.xlu0 %v27, 96
    %v43 = vpop.permute.xlu0 %42
    %v45 = vsub.f32 %v38, %v43
    %v46 = vmul.f32 %v45, %v45
    %v47 = vsel %vm39, %v46, 0.0
    %48 = vadd.xlane.f32.xlu0 %v47
    %v49 = vpop.xlane.xlu0 %48
    %v50 = vrot.slane %v49, 4
    %v51 = vadd.f32 %v49, %v50
    %v52 = vrot.slane %v51, 2
    %v53 = vadd.f32 %v51, %v52
    %v54 = vrot.slane %v53, 1
    %v55 = vadd.f32 %v53, %v54
    %s56 = vtos %v55
    %v57 = vstv %s56
    %v58 = vmul.f32 %v57, 0.5
    %v59 = vld [vmem:[%s3] sm:$0xff]
    %v60 = vld [vmem:[%s3 + $0x8] sm:$0xff]
    %v61 = vld [vmem:[%s3 + $0x10] sm:$0xff]
    %v62 = vld [vmem:[%s3 + $0x18] sm:$0xff]
    %v63 = vld [vmem:[%s3 + $0x20] sm:$0xff]
    %v64 = vld [vmem:[%s3 + $0x28] sm:$0xff]
    %v65 = vld [vmem:[%s3 + $0x30] sm:$0xff]
    %v66 = vld [vmem:[%s3 + $0x38] sm:$0xff]
    %v67 = vld [vmem:[%s3 + $0x40] sm:$0x1]
    %v68 = vld [vmem:[%s3 + $0x41] sm:$0x1]
    %v69 = vlaneseq
    %v70 = vshrl.u32 %v69, 7
    %v71 = vsub.s32 0, %v70
    %v72 = vrot.slane %v68, %v71
    %v73 = vld [vmem:[%s2] sm:$0xff]
    %v74 = vld [vmem:[%s2 + $0x8] sm:$0xff]
    %v75 = vlaneseq
    %v76 = vshrl.u32 %v75, 7
    %v77 = vsub.s32 0, %v76
    %v78 = vrot.slane %v67, %v77
    %vm79 = vcmask 261120
    %v81 = vsel %vm79, %v73, 0
    %v84 = vsel %vm79, %v74, 0
    %86 = vmatprep.subr.mxu0 0.0
    %87 = vmatpush1.msra.mxu0 %v59
    %88 = vmatprep.subr.mxu0 0.0
    %89 = vmatpush1.msra.mxu0 %v60
    %90 = vmatprep.subr.mxu0 0.0
    %91 = vmatpush1.msra.mxu0 %v61
    %92 = vmatprep.subr.mxu0 0.0
    %93 = vmatpush1.msra.mxu0 %v62
    %94 = vmatprep.subr.mxu0 0.0
    %95 = vmatpush1.msra.mxu0 0.0
    %96 = vmatprep.subr.mxu0 0.0
    %97 = vmatpush1.msra.mxu0 0.0
    %98 = vmatprep.subr.mxu0 0.0
    %99 = vmatpush1.msra.mxu0 0.0
    %100 = vmatprep.subr.mxu0 0.0
    %101 = vmatpush1.msra.mxu0 0.0
    %102 = vmatprep.subr.mxu0 0.0
    %103 = vmatpush1.msra.mxu0 0.0
    %104 = vmatprep.subr.mxu0 0.0
    %105 = vmatpush1.msra.mxu0 0.0
    %106 = vmatprep.subr.mxu0 0.0
    %107 = vmatpush1.msra.mxu0 0.0
    %108 = vmatprep.subr.mxu0 0.0
    %109 = vmatpush1.msra.mxu0 0.0
    %110 = vmatprep.subr.mxu0 0.0
    %111 = vmatpush1.msra.mxu0 0.0
    %112 = vmatprep.subr.mxu0 0.0
    %113 = vmatpush1.msra.mxu0 0.0
    %114 = vmatprep.subr.mxu0 0.0
    %115 = vmatpush1.msra.mxu0 0.0
    %116 = vmatprep.subr.mxu0 0.0
    %117 = vmatpush1.msra.mxu0 0.0
    %118 = vmatprep.subr.mxu0 0.0
    %119 = vmatpush1.msra.mxu0 0.0
    %120 = vmatprep.subr.mxu0 0.0
    %121 = vmatpush1.msra.mxu0 0.0
    %122 = vmatprep.subr.mxu0 0.0
    %123 = vmatpush1.msra.mxu0 0.0
    %124 = vmatprep.subr.mxu0 0.0
    %125 = vmatpush1.msra.mxu0 0.0
    %126 = vmatprep.subr.mxu0 0.0
    %127 = vmatpush1.msra.mxu0 0.0
    %128 = vmatprep.subr.mxu0 0.0
    %129 = vmatpush1.msra.mxu0 0.0
    %130 = vmatprep.subr.mxu0 0.0
    %131 = vmatpush1.msra.mxu0 0.0
    %132 = vmatprep.subr.mxu0 0.0
    %133 = vmatpush1.msra.mxu0 0.0
    %134 = vmatprep.subr.mxu0 0.0
    %135 = vmatpush1.msra.mxu0 0.0
    %136 = vmatprep.subr.mxu0 0.0
    %137 = vmatpush1.msra.mxu0 0.0
    %138 = vmatprep.subr.mxu0 0.0
    %139 = vmatpush1.msra.mxu0 0.0
    %140 = vmatprep.subr.mxu0 0.0
    %141 = vmatpush1.msra.mxu0 0.0
    %142 = vmatprep.subr.mxu0 0.0
    %143 = vmatpush1.msra.mxu0 0.0
    %144 = vmatprep.subr.mxu0 0.0
    %145 = vmatpush1.msra.mxu0 0.0
    %146 = vmatprep.subr.mxu0 0.0
    %147 = vmatpush1.msra.mxu0 0.0
    %148 = vmatprep.subr.mxu0 0.0
    %149 = vmatpush1.msra.mxu0 0.0
    %150 = vmatprep.mubr.f32.mxu0 0.0
    %151 = vmatmul.mubr.f32.gmra.mrb[0].mxu0 %v81
    %v152 = vpop.f32.mrb[0].mxu0
    %v153 = vadd.f32 %v78, %v152
    %v154 = vpop.f32.mrb[0].mxu0
    %155 = vmatprep.mubr.f32.mxu0 0.0
    %156 = vmatmul.mubr.f32.gmra.mrb[0].mxu0 %v84
    %v157 = vpop.f32.mrb[0].mxu0
    %v158 = vadd.f32 %v78, %v157
    %v159 = vpop.f32.mrb[0].mxu0
    %160 = vdwg.mxu0
    %v162 = vsel %vm79, 0.0, 0
    %164 = vmatprep.subr.mxu0 0.0
    %165 = vmatpush1.msra.mxu0 %v63
    %166 = vmatprep.subr.mxu0 0.0
    %167 = vmatpush1.msra.mxu0 %v64
    %168 = vmatprep.subr.mxu0 0.0
    %169 = vmatpush1.msra.mxu0 %v65
    %170 = vmatprep.subr.mxu0 0.0
    %171 = vmatpush1.msra.mxu0 %v66
    %172 = vmatprep.subr.mxu0 0.0
    %173 = vmatpush1.msra.mxu0 0.0
    %174 = vmatprep.subr.mxu0 0.0
    %175 = vmatpush1.msra.mxu0 0.0
    %176 = vmatprep.subr.mxu0 0.0
    %177 = vmatpush1.msra.mxu0 0.0
    %178 = vmatprep.subr.mxu0 0.0
    %179 = vmatpush1.msra.mxu0 0.0
    %180 = vmatprep.subr.mxu0 0.0
    %181 = vmatpush1.msra.mxu0 0.0
    %182 = vmatprep.subr.mxu0 0.0
    %183 = vmatpush1.msra.mxu0 0.0
    %184 = vmatprep.subr.mxu0 0.0
    %185 = vmatpush1.msra.mxu0 0.0
    %186 = vmatprep.subr.mxu0 0.0
    %187 = vmatpush1.msra.mxu0 0.0
    %188 = vmatprep.subr.mxu0 0.0
    %189 = vmatpush1.msra.mxu0 0.0
    %190 = vmatprep.subr.mxu0 0.0
    %191 = vmatpush1.msra.mxu0 0.0
    %192 = vmatprep.subr.mxu0 0.0
    %193 = vmatpush1.msra.mxu0 0.0
    %194 = vmatprep.subr.mxu0 0.0
    %195 = vmatpush1.msra.mxu0 0.0
    %196 = vmatprep.subr.mxu0 0.0
    %197 = vmatpush1.msra.mxu0 0.0
    %198 = vmatprep.subr.mxu0 0.0
    %199 = vmatpush1.msra.mxu0 0.0
    %200 = vmatprep.subr.mxu0 0.0
    %201 = vmatpush1.msra.mxu0 0.0
    %202 = vmatprep.subr.mxu0 0.0
    %203 = vmatpush1.msra.mxu0 0.0
    %204 = vmatprep.subr.mxu0 0.0
    %205 = vmatpush1.msra.mxu0 0.0
    %206 = vmatprep.subr.mxu0 0.0
    %207 = vmatpush1.msra.mxu0 0.0
    %208 = vmatprep.subr.mxu0 0.0
    %209 = vmatpush1.msra.mxu0 0.0
    %210 = vmatprep.subr.mxu0 0.0
    %211 = vmatpush1.msra.mxu0 0.0
    %212 = vmatprep.subr.mxu0 0.0
    %213 = vmatpush1.msra.mxu0 0.0
    %214 = vmatprep.subr.mxu0 0.0
    %215 = vmatpush1.msra.mxu0 0.0
    %216 = vmatprep.subr.mxu0 0.0
    %217 = vmatpush1.msra.mxu0 0.0
    %218 = vmatprep.subr.mxu0 0.0
    %219 = vmatpush1.msra.mxu0 0.0
    %220 = vmatprep.subr.mxu0 0.0
    %221 = vmatpush1.msra.mxu0 0.0
    %222 = vmatprep.subr.mxu0 0.0
    %223 = vmatpush1.msra.mxu0 0.0
    %224 = vmatprep.subr.mxu0 0.0
    %225 = vmatpush1.msra.mxu0 0.0
    %226 = vmatprep.subr.mxu0 0.0
    %227 = vmatpush1.msra.mxu0 0.0
    %228 = vmatprep.mubr.f32.mxu0 0.0
    %229 = vmatmul.mubr.f32.gmra.mrb[0].mxu0 %v162
    %v230 = vpop.f32.mrb[0].mxu0
    %v231 = vadd.f32 0.0, %v230
    %v232 = vpop.f32.mrb[0].mxu0
    %233 = vdwg.mxu0
    %v234 = vadd.f32 %v153, %v231
    %v235 = vmul.f32 %v234, 0.5
    %v236 = vtanh.pop %v235
    %v237 = vadd.f32 %v236, 1.0
    %v238 = vmul.f32 %v237, 0.5
    %240 = vrot.lane.b32.xlu0 %v72, 64
    %v241 = vpop.permute.xlu0 %240
    %v243 = vadd.f32 %v231, %v241
    %245 = vrot.lane.b32.xlu0 %v243, 64
    %v246 = vpop.permute.xlu0 %245
    %v248 = vmul.f32 %v238, %v246
    %250 = vrot.lane.b32.xlu0 %v248, 64
    %v251 = vpop.permute.xlu0 %250
    %v253 = vadd.f32 %v153, %v251
    %v254 = vtanh.pop %v253
    %v255 = vsub.f32 1.0, %v238
    %257 = vrot.lane.b32.xlu0 %v254, 96
    %v258 = vpop.permute.xlu0 %257
    %v260 = vmul.f32 %v255, %v258
    %v261 = vmul.f32 %v238, 0.0
    %v262 = vadd.f32 %v260, %v261
    %264 = vrot.lane.b32.xlu0 %v262, 96
    %v265 = vpop.permute.xlu0 %264
    %v266 = vsel %vm79, %v265, 0
    %268 = vmatprep.subr.mxu0 0.0
    %269 = vmatpush1.msra.mxu0 %v63
    %270 = vmatprep.subr.mxu0 0.0
    %271 = vmatpush1.msra.mxu0 %v64
    %272 = vmatprep.subr.mxu0 0.0
    %273 = vmatpush1.msra.mxu0 %v65
    %274 = vmatprep.subr.mxu0 0.0
    %275 = vmatpush1.msra.mxu0 %v66
    %276 = vmatprep.subr.mxu0 0.0
    %277 = vmatpush1.msra.mxu0 0.0
    %278 = vmatprep.subr.mxu0 0.0
    %279 = vmatpush1.msra.mxu0 0.0
    %280 = vmatprep.subr.mxu0 0.0
    %281 = vmatpush1.msra.mxu0 0.0
    %282 = vmatprep.subr.mxu0 0.0
    %283 = vmatpush1.msra.mxu0 0.0
    %284 = vmatprep.subr.mxu0 0.0
    %285 = vmatpush1.msra.mxu0 0.0
    %286 = vmatprep.subr.mxu0 0.0
    %287 = vmatpush1.msra.mxu0 0.0
    %288 = vmatprep.subr.mxu0 0.0
    %289 = vmatpush1.msra.mxu0 0.0
    %290 = vmatprep.subr.mxu0 0.0
    %291 = vmatpush1.msra.mxu0 0.0
    %292 = vmatprep.subr.mxu0 0.0
    %293 = vmatpush1.msra.mxu0 0.0
    %294 = vmatprep.subr.mxu0 0.0
    %295 = vmatpush1.msra.mxu0 0.0
    %296 = vmatprep.subr.mxu0 0.0
    %297 = vmatpush1.msra.mxu0 0.0
    %298 = vmatprep.subr.mxu0 0.0
    %299 = vmatpush1.msra.mxu0 0.0
    %300 = vmatprep.subr.mxu0 0.0
    %301 = vmatpush1.msra.mxu0 0.0
    %302 = vmatprep.subr.mxu0 0.0
    %303 = vmatpush1.msra.mxu0 0.0
    %304 = vmatprep.subr.mxu0 0.0
    %305 = vmatpush1.msra.mxu0 0.0
    %306 = vmatprep.subr.mxu0 0.0
    %307 = vmatpush1.msra.mxu0 0.0
    %308 = vmatprep.subr.mxu0 0.0
    %309 = vmatpush1.msra.mxu0 0.0
    %310 = vmatprep.subr.mxu0 0.0
    %311 = vmatpush1.msra.mxu0 0.0
    %312 = vmatprep.subr.mxu0 0.0
    %313 = vmatpush1.msra.mxu0 0.0
    %314 = vmatprep.subr.mxu0 0.0
    %315 = vmatpush1.msra.mxu0 0.0
    %316 = vmatprep.subr.mxu0 0.0
    %317 = vmatpush1.msra.mxu0 0.0
    %318 = vmatprep.subr.mxu0 0.0
    %319 = vmatpush1.msra.mxu0 0.0
    %320 = vmatprep.subr.mxu0 0.0
    %321 = vmatpush1.msra.mxu0 0.0
    %322 = vmatprep.subr.mxu0 0.0
    %323 = vmatpush1.msra.mxu0 0.0
    %324 = vmatprep.subr.mxu0 0.0
    %325 = vmatpush1.msra.mxu0 0.0
    %326 = vmatprep.subr.mxu0 0.0
    %327 = vmatpush1.msra.mxu0 0.0
    %328 = vmatprep.subr.mxu0 0.0
    %329 = vmatpush1.msra.mxu0 0.0
    %330 = vmatprep.subr.mxu0 0.0
    %331 = vmatpush1.msra.mxu0 0.0
    %332 = vmatprep.mubr.f32.mxu0 0.0
    %333 = vmatmul.mubr.f32.gmra.mrb[0].mxu0 %v266
    %v334 = vpop.f32.mrb[0].mxu0
    %v335 = vadd.f32 0.0, %v334
    %v336 = vpop.f32.mrb[0].mxu0
    %337 = vdwg.mxu0
    %v339 = vrot.slane %v335, 6
    %v341 = vadd.f32 %v153, %v339
    %v342 = vmul.f32 %v341, 0.5
    %v343 = vtanh.pop %v342
    %v344 = vadd.f32 %v343, 1.0
    %v345 = vmul.f32 %v344, 0.5
    %v346 = vadd.f32 %v335, %v241
    %v348 = vrot.slane %v346, 6
    %349 = vrot.lane.b32.xlu0 %v348, 64
    %v350 = vpop.permute.xlu0 %349
    %v352 = vmul.f32 %v345, %v350
    %354 = vrot.lane.b32.xlu0 %v352, 64
    %v355 = vpop.permute.xlu0 %354
    %v357 = vadd.f32 %v153, %v355
    %v358 = vtanh.pop %v357
    %v359 = vsub.f32 1.0, %v345
    %361 = vrot.lane.b32.xlu0 %v358, 96
    %v362 = vpop.permute.xlu0 %361
    %v364 = vmul.f32 %v359, %v362
    %v365 = vrot.slane %v262, 6
    %v367 = vmul.f32 %v345, %v365
    %v368 = vadd.f32 %v364, %v367
    %v370 = vrot.slane %v368, 2
    %371 = vrot.lane.b32.xlu0 %v370, 96
    %v372 = vpop.permute.xlu0 %371
    %v373 = vsel %vm79, %v372, 0
    %375 = vmatprep.subr.mxu0 0.0
    %376 = vmatpush1.msra.mxu0 %v63
    %377 = vmatprep.subr.mxu0 0.0
    %378 = vmatpush1.msra.mxu0 %v64
    %379 = vmatprep.subr.mxu0 0.0
    %380 = vmatpush1.msra.mxu0 %v65
    %381 = vmatprep.subr.mxu0 0.0
    %382 = vmatpush1.msra.mxu0 %v66
    %383 = vmatprep.subr.mxu0 0.0
    %384 = vmatpush1.msra.mxu0 0.0
    %385 = vmatprep.subr.mxu0 0.0
    %386 = vmatpush1.msra.mxu0 0.0
    %387 = vmatprep.subr.mxu0 0.0
    %388 = vmatpush1.msra.mxu0 0.0
    %389 = vmatprep.subr.mxu0 0.0
    %390 = vmatpush1.msra.mxu0 0.0
    %391 = vmatprep.subr.mxu0 0.0
    %392 = vmatpush1.msra.mxu0 0.0
    %393 = vmatprep.subr.mxu0 0.0
    %394 = vmatpush1.msra.mxu0 0.0
    %395 = vmatprep.subr.mxu0 0.0
    %396 = vmatpush1.msra.mxu0 0.0
    %397 = vmatprep.subr.mxu0 0.0
    %398 = vmatpush1.msra.mxu0 0.0
    %399 = vmatprep.subr.mxu0 0.0
    %400 = vmatpush1.msra.mxu0 0.0
    %401 = vmatprep.subr.mxu0 0.0
    %402 = vmatpush1.msra.mxu0 0.0
    %403 = vmatprep.subr.mxu0 0.0
    %404 = vmatpush1.msra.mxu0 0.0
    %405 = vmatprep.subr.mxu0 0.0
    %406 = vmatpush1.msra.mxu0 0.0
    %407 = vmatprep.subr.mxu0 0.0
    %408 = vmatpush1.msra.mxu0 0.0
    %409 = vmatprep.subr.mxu0 0.0
    %410 = vmatpush1.msra.mxu0 0.0
    %411 = vmatprep.subr.mxu0 0.0
    %412 = vmatpush1.msra.mxu0 0.0
    %413 = vmatprep.subr.mxu0 0.0
    %414 = vmatpush1.msra.mxu0 0.0
    %415 = vmatprep.subr.mxu0 0.0
    %416 = vmatpush1.msra.mxu0 0.0
    %417 = vmatprep.subr.mxu0 0.0
    %418 = vmatpush1.msra.mxu0 0.0
    %419 = vmatprep.subr.mxu0 0.0
    %420 = vmatpush1.msra.mxu0 0.0
    %421 = vmatprep.subr.mxu0 0.0
    %422 = vmatpush1.msra.mxu0 0.0
    %423 = vmatprep.subr.mxu0 0.0
    %424 = vmatpush1.msra.mxu0 0.0
    %425 = vmatprep.subr.mxu0 0.0
    %426 = vmatpush1.msra.mxu0 0.0
    %427 = vmatprep.subr.mxu0 0.0
    %428 = vmatpush1.msra.mxu0 0.0
    %429 = vmatprep.subr.mxu0 0.0
    %430 = vmatpush1.msra.mxu0 0.0
    %431 = vmatprep.subr.mxu0 0.0
    %432 = vmatpush1.msra.mxu0 0.0
    %433 = vmatprep.subr.mxu0 0.0
    %434 = vmatpush1.msra.mxu0 0.0
    %435 = vmatprep.subr.mxu0 0.0
    %436 = vmatpush1.msra.mxu0 0.0
    %437 = vmatprep.subr.mxu0 0.0
    %438 = vmatpush1.msra.mxu0 0.0
    %439 = vmatprep.mubr.f32.mxu0 0.0
    %440 = vmatmul.mubr.f32.gmra.mrb[0].mxu0 %v373
    %v441 = vpop.f32.mrb[0].mxu0
    %v442 = vadd.f32 0.0, %v441
    %v443 = vpop.f32.mrb[0].mxu0
    %444 = vdwg.mxu0
    %v446 = vrot.slane %v442, 4
    %v448 = vadd.f32 %v153, %v446
    %v449 = vmul.f32 %v448, 0.5
    %v450 = vtanh.pop %v449
    %v451 = vadd.f32 %v450, 1.0
    %v452 = vmul.f32 %v451, 0.5
    %v453 = vadd.f32 %v442, %v241
    %v455 = vrot.slane %v453, 4
    %456 = vrot.lane.b32.xlu0 %v455, 64
    %v457 = vpop.permute.xlu0 %456
    %v459 = vmul.f32 %v452, %v457
    %461 = vrot.lane.b32.xlu0 %v459, 64
    %v462 = vpop.permute.xlu0 %461
    %v464 = vadd.f32 %v153, %v462
    %v465 = vtanh.pop %v464
    %v466 = vsub.f32 1.0, %v452
    %468 = vrot.lane.b32.xlu0 %v465, 96
    %v469 = vpop.permute.xlu0 %468
    %v471 = vmul.f32 %v466, %v469
    %v472 = vrot.slane %v368, 6
    %v474 = vmul.f32 %v452, %v472
    %v475 = vadd.f32 %v471, %v474
    %v477 = vrot.slane %v475, 4
    %478 = vrot.lane.b32.xlu0 %v477, 96
    %v479 = vpop.permute.xlu0 %478
    %v480 = vsel %vm79, %v479, 0
    %482 = vmatprep.subr.mxu0 0.0
    %483 = vmatpush1.msra.mxu0 %v63
    %484 = vmatprep.subr.mxu0 0.0
    %485 = vmatpush1.msra.mxu0 %v64
    %486 = vmatprep.subr.mxu0 0.0
    %487 = vmatpush1.msra.mxu0 %v65
    %488 = vmatprep.subr.mxu0 0.0
    %489 = vmatpush1.msra.mxu0 %v66
    %490 = vmatprep.subr.mxu0 0.0
    %491 = vmatpush1.msra.mxu0 0.0
    %492 = vmatprep.subr.mxu0 0.0
    %493 = vmatpush1.msra.mxu0 0.0
    %494 = vmatprep.subr.mxu0 0.0
    %495 = vmatpush1.msra.mxu0 0.0
    %496 = vmatprep.subr.mxu0 0.0
    %497 = vmatpush1.msra.mxu0 0.0
    %498 = vmatprep.subr.mxu0 0.0
    %499 = vmatpush1.msra.mxu0 0.0
    %500 = vmatprep.subr.mxu0 0.0
    %501 = vmatpush1.msra.mxu0 0.0
    %502 = vmatprep.subr.mxu0 0.0
    %503 = vmatpush1.msra.mxu0 0.0
    %504 = vmatprep.subr.mxu0 0.0
    %505 = vmatpush1.msra.mxu0 0.0
    %506 = vmatprep.subr.mxu0 0.0
    %507 = vmatpush1.msra.mxu0 0.0
    %508 = vmatprep.subr.mxu0 0.0
    %509 = vmatpush1.msra.mxu0 0.0
    %510 = vmatprep.subr.mxu0 0.0
    %511 = vmatpush1.msra.mxu0 0.0
    %512 = vmatprep.subr.mxu0 0.0
    %513 = vmatpush1.msra.mxu0 0.0
    %514 = vmatprep.subr.mxu0 0.0
    %515 = vmatpush1.msra.mxu0 0.0
    %516 = vmatprep.subr.mxu0 0.0
    %517 = vmatpush1.msra.mxu0 0.0
    %518 = vmatprep.subr.mxu0 0.0
    %519 = vmatpush1.msra.mxu0 0.0
    %520 = vmatprep.subr.mxu0 0.0
    %521 = vmatpush1.msra.mxu0 0.0
    %522 = vmatprep.subr.mxu0 0.0
    %523 = vmatpush1.msra.mxu0 0.0
    %524 = vmatprep.subr.mxu0 0.0
    %525 = vmatpush1.msra.mxu0 0.0
    %526 = vmatprep.subr.mxu0 0.0
    %527 = vmatpush1.msra.mxu0 0.0
    %528 = vmatprep.subr.mxu0 0.0
    %529 = vmatpush1.msra.mxu0 0.0
    %530 = vmatprep.subr.mxu0 0.0
    %531 = vmatpush1.msra.mxu0 0.0
    %532 = vmatprep.subr.mxu0 0.0
    %533 = vmatpush1.msra.mxu0 0.0
    %534 = vmatprep.subr.mxu0 0.0
    %535 = vmatpush1.msra.mxu0 0.0
    %536 = vmatprep.subr.mxu0 0.0
    %537 = vmatpush1.msra.mxu0 0.0
    %538 = vmatprep.subr.mxu0 0.0
    %539 = vmatpush1.msra.mxu0 0.0
    %540 = vmatprep.subr.mxu0 0.0
    %541 = vmatpush1.msra.mxu0 0.0
    %542 = vmatprep.subr.mxu0 0.0
    %543 = vmatpush1.msra.mxu0 0.0
    %544 = vmatprep.subr.mxu0 0.0
    %545 = vmatpush1.msra.mxu0 0.0
    %546 = vmatprep.mubr.f32.mxu0 0.0
    %547 = vmatmul.mubr.f32.gmra.mrb[0].mxu0 %v480
    %v548 = vpop.f32.mrb[0].mxu0
    %v549 = vadd.f32 0.0, %v548
    %v550 = vpop.f32.mrb[0].mxu0
    %551 = vdwg.mxu0
    %v553 = vrot.slane %v549, 2
    %v555 = vadd.f32 %v153, %v553
    %v556 = vmul.f32 %v555, 0.5
    %v557 = vtanh.pop %v556
    %v558 = vadd.f32 %v557, 1.0
    %v559 = vmul.f32 %v558, 0.5
    %v560 = vadd.f32 %v549, %v241
    %v562 = vrot.slane %v560, 2
    %563 = vrot.lane.b32.xlu0 %v562, 64
    %v564 = vpop.permute.xlu0 %563
    %v566 = vmul.f32 %v559, %v564
    %568 = vrot.lane.b32.xlu0 %v566, 64
    %v569 = vpop.permute.xlu0 %568
    %v571 = vadd.f32 %v153, %v569
    %v572 = vtanh.pop %v571
    %v573 = vsub.f32 1.0, %v559
    %575 = vrot.lane.b32.xlu0 %v572, 96
    %v576 = vpop.permute.xlu0 %575
    %v578 = vmul.f32 %v573, %v576
    %v579 = vrot.slane %v475, 6
    %v581 = vmul.f32 %v559, %v579
    %v582 = vadd.f32 %v578, %v581
    %v584 = vrot.slane %v582, 6
    %585 = vrot.lane.b32.xlu0 %v584, 96
    %v586 = vpop.permute.xlu0 %585
    %v587 = vsel %vm79, %v586, 0
    %589 = vmatprep.subr.mxu0 0.0
    %590 = vmatpush1.msra.mxu0 %v63
    %591 = vmatprep.subr.mxu0 0.0
    %592 = vmatpush1.msra.mxu0 %v64
    %593 = vmatprep.subr.mxu0 0.0
    %594 = vmatpush1.msra.mxu0 %v65
    %595 = vmatprep.subr.mxu0 0.0
    %596 = vmatpush1.msra.mxu0 %v66
    %597 = vmatprep.subr.mxu0 0.0
    %598 = vmatpush1.msra.mxu0 0.0
    %599 = vmatprep.subr.mxu0 0.0
    %600 = vmatpush1.msra.mxu0 0.0
    %601 = vmatprep.subr.mxu0 0.0
    %602 = vmatpush1.msra.mxu0 0.0
    %603 = vmatprep.subr.mxu0 0.0
    %604 = vmatpush1.msra.mxu0 0.0
    %605 = vmatprep.subr.mxu0 0.0
    %606 = vmatpush1.msra.mxu0 0.0
    %607 = vmatprep.subr.mxu0 0.0
    %608 = vmatpush1.msra.mxu0 0.0
    %609 = vmatprep.subr.mxu0 0.0
    %610 = vmatpush1.msra.mxu0 0.0
    %611 = vmatprep.subr.mxu0 0.0
    %612 = vmatpush1.msra.mxu0 0.0
    %613 = vmatprep.subr.mxu0 0.0
    %614 = vmatpush1.msra.mxu0 0.0
    %615 = vmatprep.subr.mxu0 0.0
    %616 = vmatpush1.msra.mxu0 0.0
    %617 = vmatprep.subr.mxu0 0.0
    %618 = vmatpush1.msra.mxu0 0.0
    %619 = vmatprep.subr.mxu0 0.0
    %620 = vmatpush1.msra.mxu0 0.0
    %621 = vmatprep.subr.mxu0 0.0
    %622 = vmatpush1.msra.mxu0 0.0
    %623 = vmatprep.subr.mxu0 0.0
    %624 = vmatpush1.msra.mxu0 0.0
    %625 = vmatprep.subr.mxu0 0.0
    %626 = vmatpush1.msra.mxu0 0.0
    %627 = vmatprep.subr.mxu0 0.0
    %628 = vmatpush1.msra.mxu0 0.0
    %629 = vmatprep.subr.mxu0 0.0
    %630 = vmatpush1.msra.mxu0 0.0
    %631 = vmatprep.subr.mxu0 0.0
    %632 = vmatpush1.msra.mxu0 0.0
    %633 = vmatprep.subr.mxu0 0.0
    %634 = vmatpush1.msra.mxu0 0.0
    %635 = vmatprep.subr.mxu0 0.0
    %636 = vmatpush1.msra.mxu0 0.0
    %637 = vmatprep.subr.mxu0 0.0
    %638 = vmatpush1.msra.mxu0 0.0
    %639 = vmatprep.subr.mxu0 0.0
    %640 = vmatpush1.msra.mxu0 0.0
    %641 = vmatprep.subr.mxu0 0.0
    %642 = vmatpush1.msra.mxu0 0.0
    %643 = vmatprep.subr.mxu0 0.0
    %644 = vmatpush1.msra.mxu0 0.0
    %645 = vmatprep.subr.mxu0 0.0
    %646 = vmatpush1.msra.mxu0 0.0
    %647 = vmatprep.subr.mxu0 0.0
    %648 = vmatpush1.msra.mxu0 0.0
    %649 = vmatprep.subr.mxu0 0.0
    %650 = vmatpush1.msra.mxu0 0.0
    %651 = vmatprep.subr.mxu0 0.0
    %652 = vmatpush1.msra.mxu0 0.0
    %653 = vmatprep.mubr.f32.mxu0 0.0
    %654 = vmatmul.mubr.f32.gmra.mrb[0].mxu0 %v587
    %v655 = vpop.f32.mrb[0].mxu0
    %v656 = vadd.f32 0.0, %v655
    %v657 = vpop.f32.mrb[0].mxu0
    %658 = vdwg.mxu0
    %v659 = vadd.f32 %v158, %v656
    %v660 = vmul.f32 %v659, 0.5
    %v661 = vtanh.pop %v660
    %v662 = vadd.f32 %v661, 1.0
    %v663 = vmul.f32 %v662, 0.5
    %v664 = vadd.f32 %v656, %v241
    %666 = vrot.lane.b32.xlu0 %v664, 64
    %v667 = vpop.permute.xlu0 %666
    %v669 = vmul.f32 %v663, %v667
    %671 = vrot.lane.b32.xlu0 %v669, 64
    %v672 = vpop.permute.xlu0 %671
    %v674 = vadd.f32 %v158, %v672
    %v675 = vtanh.pop %v674
    %v676 = vsub.f32 1.0, %v663
    %678 = vrot.lane.b32.xlu0 %v675, 96
    %v679 = vpop.permute.xlu0 %678
    %v681 = vmul.f32 %v676, %v679
    %v683 = vmul.f32 %v663, %v584
    %v684 = vadd.f32 %v681, %v683
    %686 = vrot.lane.b32.xlu0 %v684, 96
    %v687 = vpop.permute.xlu0 %686
    %v688 = vsel %vm79, %v687, 0
    %690 = vmatprep.subr.mxu0 0.0
    %691 = vmatpush1.msra.mxu0 %v63
    %692 = vmatprep.subr.mxu0 0.0
    %693 = vmatpush1.msra.mxu0 %v64
    %694 = vmatprep.subr.mxu0 0.0
    %695 = vmatpush1.msra.mxu0 %v65
    %696 = vmatprep.subr.mxu0 0.0
    %697 = vmatpush1.msra.mxu0 %v66
    %698 = vmatprep.subr.mxu0 0.0
    %699 = vmatpush1.msra.mxu0 0.0
    %700 = vmatprep.subr.mxu0 0.0
    %701 = vmatpush1.msra.mxu0 0.0
    %702 = vmatprep.subr.mxu0 0.0
    %703 = vmatpush1.msra.mxu0 0.0
    %704 = vmatprep.subr.mxu0 0.0
    %705 = vmatpush1.msra.mxu0 0.0
    %706 = vmatprep.subr.mxu0 0.0
    %707 = vmatpush1.msra.mxu0 0.0
    %708 = vmatprep.subr.mxu0 0.0
    %709 = vmatpush1.msra.mxu0 0.0
    %710 = vmatprep.subr.mxu0 0.0
    %711 = vmatpush1.msra.mxu0 0.0
    %712 = vmatprep.subr.mxu0 0.0
    %713 = vmatpush1.msra.mxu0 0.0
    %714 = vmatprep.subr.mxu0 0.0
    %715 = vmatpush1.msra.mxu0 0.0
    %716 = vmatprep.subr.mxu0 0.0
    %717 = vmatpush1.msra.mxu0 0.0
    %718 = vmatprep.subr.mxu0 0.0
    %719 = vmatpush1.msra.mxu0 0.0
    %720 = vmatprep.subr.mxu0 0.0
    %721 = vmatpush1.msra.mxu0 0.0
    %722 = vmatprep.subr.mxu0 0.0
    %723 = vmatpush1.msra.mxu0 0.0
    %724 = vmatprep.subr.mxu0 0.0
    %725 = vmatpush1.msra.mxu0 0.0
    %726 = vmatprep.subr.mxu0 0.0
    %727 = vmatpush1.msra.mxu0 0.0
    %728 = vmatprep.subr.mxu0 0.0
    %729 = vmatpush1.msra.mxu0 0.0
    %730 = vmatprep.subr.mxu0 0.0
    %731 = vmatpush1.msra.mxu0 0.0
    %732 = vmatprep.subr.mxu0 0.0
    %733 = vmatpush1.msra.mxu0 0.0
    %734 = vmatprep.subr.mxu0 0.0
    %735 = vmatpush1.msra.mxu0 0.0
    %736 = vmatprep.subr.mxu0 0.0
    %737 = vmatpush1.msra.mxu0 0.0
    %738 = vmatprep.subr.mxu0 0.0
    %739 = vmatpush1.msra.mxu0 0.0
    %740 = vmatprep.subr.mxu0 0.0
    %741 = vmatpush1.msra.mxu0 0.0
    %742 = vmatprep.subr.mxu0 0.0
    %743 = vmatpush1.msra.mxu0 0.0
    %744 = vmatprep.subr.mxu0 0.0
    %745 = vmatpush1.msra.mxu0 0.0
    %746 = vmatprep.subr.mxu0 0.0
    %747 = vmatpush1.msra.mxu0 0.0
    %748 = vmatprep.subr.mxu0 0.0
    %749 = vmatpush1.msra.mxu0 0.0
    %750 = vmatprep.subr.mxu0 0.0
    %751 = vmatpush1.msra.mxu0 0.0
    %752 = vmatprep.subr.mxu0 0.0
    %753 = vmatpush1.msra.mxu0 0.0
    %754 = vmatprep.mubr.f32.mxu0 0.0
    %755 = vmatmul.mubr.f32.gmra.mrb[0].mxu0 %v688
    %v756 = vpop.f32.mrb[0].mxu0
    %v757 = vadd.f32 0.0, %v756
    %v758 = vpop.f32.mrb[0].mxu0
    %759 = vdwg.mxu0
    %v761 = vrot.slane %v757, 6
    %v763 = vadd.f32 %v158, %v761
    %v764 = vmul.f32 %v763, 0.5
    %v765 = vtanh.pop %v764
    %v766 = vadd.f32 %v765, 1.0
    %v767 = vmul.f32 %v766, 0.5
    %v768 = vadd.f32 %v757, %v241
    %v770 = vrot.slane %v768, 6
    %771 = vrot.lane.b32.xlu0 %v770, 64
    %v772 = vpop.permute.xlu0 %771
    %v774 = vmul.f32 %v767, %v772
    %776 = vrot.lane.b32.xlu0 %v774, 64
    %v777 = vpop.permute.xlu0 %776
    %v779 = vadd.f32 %v158, %v777
    %v780 = vtanh.pop %v779
    %v781 = vsub.f32 1.0, %v767
    %783 = vrot.lane.b32.xlu0 %v780, 96
    %v784 = vpop.permute.xlu0 %783
    %v786 = vmul.f32 %v781, %v784
    %v787 = vrot.slane %v684, 6
    %v789 = vmul.f32 %v767, %v787
    %v790 = vadd.f32 %v786, %v789
    %v792 = vrot.slane %v790, 2
    %793 = vrot.lane.b32.xlu0 %v792, 96
    %v794 = vpop.permute.xlu0 %793
    %v795 = vsel %vm79, %v794, 0
    %797 = vmatprep.subr.mxu0 0.0
    %798 = vmatpush1.msra.mxu0 %v63
    %799 = vmatprep.subr.mxu0 0.0
    %800 = vmatpush1.msra.mxu0 %v64
    %801 = vmatprep.subr.mxu0 0.0
    %802 = vmatpush1.msra.mxu0 %v65
    %803 = vmatprep.subr.mxu0 0.0
    %804 = vmatpush1.msra.mxu0 %v66
    %805 = vmatprep.subr.mxu0 0.0
    %806 = vmatpush1.msra.mxu0 0.0
    %807 = vmatprep.subr.mxu0 0.0
    %808 = vmatpush1.msra.mxu0 0.0
    %809 = vmatprep.subr.mxu0 0.0
    %810 = vmatpush1.msra.mxu0 0.0
    %811 = vmatprep.subr.mxu0 0.0
    %812 = vmatpush1.msra.mxu0 0.0
    %813 = vmatprep.subr.mxu0 0.0
    %814 = vmatpush1.msra.mxu0 0.0
    %815 = vmatprep.subr.mxu0 0.0
    %816 = vmatpush1.msra.mxu0 0.0
    %817 = vmatprep.subr.mxu0 0.0
    %818 = vmatpush1.msra.mxu0 0.0
    %819 = vmatprep.subr.mxu0 0.0
    %820 = vmatpush1.msra.mxu0 0.0
    %821 = vmatprep.subr.mxu0 0.0
    %822 = vmatpush1.msra.mxu0 0.0
    %823 = vmatprep.subr.mxu0 0.0
    %824 = vmatpush1.msra.mxu0 0.0
    %825 = vmatprep.subr.mxu0 0.0
    %826 = vmatpush1.msra.mxu0 0.0
    %827 = vmatprep.subr.mxu0 0.0
    %828 = vmatpush1.msra.mxu0 0.0
    %829 = vmatprep.subr.mxu0 0.0
    %830 = vmatpush1.msra.mxu0 0.0
    %831 = vmatprep.subr.mxu0 0.0
    %832 = vmatpush1.msra.mxu0 0.0
    %833 = vmatprep.subr.mxu0 0.0
    %834 = vmatpush1.msra.mxu0 0.0
    %835 = vmatprep.subr.mxu0 0.0
    %836 = vmatpush1.msra.mxu0 0.0
    %837 = vmatprep.subr.mxu0 0.0
    %838 = vmatpush1.msra.mxu0 0.0
    %839 = vmatprep.subr.mxu0 0.0
    %840 = vmatpush1.msra.mxu0 0.0
    %841 = vmatprep.subr.mxu0 0.0
    %842 = vmatpush1.msra.mxu0 0.0
    %843 = vmatprep.subr.mxu0 0.0
    %844 = vmatpush1.msra.mxu0 0.0
    %845 = vmatprep.subr.mxu0 0.0
    %846 = vmatpush1.msra.mxu0 0.0
    %847 = vmatprep.subr.mxu0 0.0
    %848 = vmatpush1.msra.mxu0 0.0
    %849 = vmatprep.subr.mxu0 0.0
    %850 = vmatpush1.msra.mxu0 0.0
    %851 = vmatprep.subr.mxu0 0.0
    %852 = vmatpush1.msra.mxu0 0.0
    %853 = vmatprep.subr.mxu0 0.0
    %854 = vmatpush1.msra.mxu0 0.0
    %855 = vmatprep.subr.mxu0 0.0
    %856 = vmatpush1.msra.mxu0 0.0
    %857 = vmatprep.subr.mxu0 0.0
    %858 = vmatpush1.msra.mxu0 0.0
    %859 = vmatprep.subr.mxu0 0.0
    %860 = vmatpush1.msra.mxu0 0.0
    %861 = vmatprep.mubr.f32.mxu0 0.0
    %862 = vmatmul.mubr.f32.gmra.mrb[0].mxu0 %v795
    %v863 = vpop.f32.mrb[0].mxu0
    %v864 = vadd.f32 0.0, %v863
    %v865 = vpop.f32.mrb[0].mxu0
    %866 = vdwg.mxu0
    %v868 = vrot.slane %v864, 4
    %v870 = vadd.f32 %v158, %v868
    %v871 = vmul.f32 %v870, 0.5
    %v872 = vtanh.pop %v871
    %v873 = vadd.f32 %v872, 1.0
    %v874 = vmul.f32 %v873, 0.5
    %v875 = vadd.f32 %v864, %v241
    %v877 = vrot.slane %v875, 4
    %878 = vrot.lane.b32.xlu0 %v877, 64
    %v879 = vpop.permute.xlu0 %878
    %v881 = vmul.f32 %v874, %v879
    %883 = vrot.lane.b32.xlu0 %v881, 64
    %v884 = vpop.permute.xlu0 %883
    %v886 = vadd.f32 %v158, %v884
    %v887 = vtanh.pop %v886
    %v888 = vsub.f32 1.0, %v874
    %890 = vrot.lane.b32.xlu0 %v887, 96
    %v891 = vpop.permute.xlu0 %890
    %v893 = vmul.f32 %v888, %v891
    %v894 = vrot.slane %v790, 6
    %v896 = vmul.f32 %v874, %v894
    %v897 = vadd.f32 %v893, %v896
    %v899 = vrot.slane %v897, 4
    %900 = vrot.lane.b32.xlu0 %v899, 96
    %v901 = vpop.permute.xlu0 %900
    %v902 = vsel %vm79, %v901, 0
    %904 = vmatprep.subr.mxu0 0.0
    %905 = vmatpush1.msra.mxu0 %v63
    %906 = vmatprep.subr.mxu0 0.0
    %907 = vmatpush1.msra.mxu0 %v64
    %908 = vmatprep.subr.mxu0 0.0
    %909 = vmatpush1.msra.mxu0 %v65
    %910 = vmatprep.subr.mxu0 0.0
    %911 = vmatpush1.msra.mxu0 %v66
    %912 = vmatprep.subr.mxu0 0.0
    %913 = vmatpush1.msra.mxu0 0.0
    %914 = vmatprep.subr.mxu0 0.0
    %915 = vmatpush1.msra.mxu0 0.0
    %916 = vmatprep.subr.mxu0 0.0
    %917 = vmatpush1.msra.mxu0 0.0
    %918 = vmatprep.subr.mxu0 0.0
    %919 = vmatpush1.msra.mxu0 0.0
    %920 = vmatprep.subr.mxu0 0.0
    %921 = vmatpush1.msra.mxu0 0.0
    %922 = vmatprep.subr.mxu0 0.0
    %923 = vmatpush1.msra.mxu0 0.0
    %924 = vmatprep.subr.mxu0 0.0
    %925 = vmatpush1.msra.mxu0 0.0
    %926 = vmatprep.subr.mxu0 0.0
    %927 = vmatpush1.msra.mxu0 0.0
    %928 = vmatprep.subr.mxu0 0.0
    %929 = vmatpush1.msra.mxu0 0.0
    %930 = vmatprep.subr.mxu0 0.0
    %931 = vmatpush1.msra.mxu0 0.0
    %932 = vmatprep.subr.mxu0 0.0
    %933 = vmatpush1.msra.mxu0 0.0
    %934 = vmatprep.subr.mxu0 0.0
    %935 = vmatpush1.msra.mxu0 0.0
    %936 = vmatprep.subr.mxu0 0.0
    %937 = vmatpush1.msra.mxu0 0.0
    %938 = vmatprep.subr.mxu0 0.0
    %939 = vmatpush1.msra.mxu0 0.0
    %940 = vmatprep.subr.mxu0 0.0
    %941 = vmatpush1.msra.mxu0 0.0
    %942 = vmatprep.subr.mxu0 0.0
    %943 = vmatpush1.msra.mxu0 0.0
    %944 = vmatprep.subr.mxu0 0.0
    %945 = vmatpush1.msra.mxu0 0.0
    %946 = vmatprep.subr.mxu0 0.0
    %947 = vmatpush1.msra.mxu0 0.0
    %948 = vmatprep.subr.mxu0 0.0
    %949 = vmatpush1.msra.mxu0 0.0
    %950 = vmatprep.subr.mxu0 0.0
    %951 = vmatpush1.msra.mxu0 0.0
    %952 = vmatprep.subr.mxu0 0.0
    %953 = vmatpush1.msra.mxu0 0.0
    %954 = vmatprep.subr.mxu0 0.0
    %955 = vmatpush1.msra.mxu0 0.0
    %956 = vmatprep.subr.mxu0 0.0
    %957 = vmatpush1.msra.mxu0 0.0
    %958 = vmatprep.subr.mxu0 0.0
    %959 = vmatpush1.msra.mxu0 0.0
    %960 = vmatprep.subr.mxu0 0.0
    %961 = vmatpush1.msra.mxu0 0.0
    %962 = vmatprep.subr.mxu0 0.0
    %963 = vmatpush1.msra.mxu0 0.0
    %964 = vmatprep.subr.mxu0 0.0
    %965 = vmatpush1.msra.mxu0 0.0
    %966 = vmatprep.subr.mxu0 0.0
    %967 = vmatpush1.msra.mxu0 0.0
    %968 = vmatprep.mubr.f32.mxu0 0.0
    %969 = vmatmul.mubr.f32.gmra.mrb[0].mxu0 %v902
    %v970 = vpop.f32.mrb[0].mxu0
    %v971 = vadd.f32 0.0, %v970
    %v972 = vpop.f32.mrb[0].mxu0
    %973 = vdwg.mxu0
    %v975 = vrot.slane %v971, 2
    %v977 = vadd.f32 %v158, %v975
    %v978 = vmul.f32 %v977, 0.5
    %v979 = vtanh.pop %v978
    %v980 = vadd.f32 %v979, 1.0
    %v981 = vmul.f32 %v980, 0.5
    %v982 = vadd.f32 %v971, %v241
    %v984 = vrot.slane %v982, 2
    %985 = vrot.lane.b32.xlu0 %v984, 64
    %v986 = vpop.permute.xlu0 %985
    %v988 = vmul.f32 %v981, %v986
    %990 = vrot.lane.b32.xlu0 %v988, 64
    %v991 = vpop.permute.xlu0 %990
    %v993 = vadd.f32 %v158, %v991
    %v994 = vtanh.pop %v993
    %v995 = vsub.f32 1.0, %v981
    %997 = vrot.lane.b32.xlu0 %v994, 96
    %v998 = vpop.permute.xlu0 %997
    %v1000 = vmul.f32 %v995, %v998
    %v1001 = vrot.slane %v897, 6
    %v1003 = vmul.f32 %v981, %v1001
    %v1004 = vadd.f32 %v1000, %v1003
    %vm1005 = vcmask 1041408
    %v1006 = vsel %vm1005, %v262, %v368
    %vm1007 = vcmask 1043456
    %v1008 = vsel %vm1007, %v1006, %v475
    %vm1009 = vcmask 1045504
    %v1010 = vsel %vm1009, %v1008, %v582
    %v1011 = vsel %vm1005, %v684, %v790
    %v1012 = vsel %vm1007, %v1011, %v897
    %v1013 = vsel %vm1009, %v1012, %v1004
    %v1014 = vld [vmem:[%s4] sm:$0xff]
    %v1015 = vld [vmem:[%s4 + $0x8] sm:$0xff]
    %v1016 = vld [vmem:[%s4 + $0x10] sm:$0xff]
    %v1017 = vld [vmem:[%s4 + $0x18] sm:$0xff]
    %v1018 = vld [vmem:[%s4 + $0x20] sm:$0x1]
    %v1019 = vlaneseq
    %v1020 = vshrl.u32 %v1019, 7
    %v1021 = vsub.s32 0, %v1020
    %v1022 = vrot.slane %v1018, %v1021
    %1025 = vrot.lane.b32.xlu0 %v1010, 96
    %v1026 = vpop.permute.xlu0 %1025
    %1027 = vrot.lane.b32.xlu0 %v1013, 96
    %v1028 = vpop.permute.xlu0 %1027
    %v1029 = vsel %vm79, %v1026, 0
    %v1031 = vsel %vm79, %v1028, 0
    %1033 = vmatprep.subr.mxu0 0.0
    %1034 = vmatpush1.msra.mxu0 %v1014
    %1035 = vmatprep.subr.mxu0 0.0
    %1036 = vmatpush1.msra.mxu0 %v1015
    %1037 = vmatprep.subr.mxu0 0.0
    %1038 = vmatpush1.msra.mxu0 %v1016
    %1039 = vmatprep.subr.mxu0 0.0
    %1040 = vmatpush1.msra.mxu0 %v1017
    %1041 = vmatprep.subr.mxu0 0.0
    %1042 = vmatpush1.msra.mxu0 0.0
    %1043 = vmatprep.subr.mxu0 0.0
    %1044 = vmatpush1.msra.mxu0 0.0
    %1045 = vmatprep.subr.mxu0 0.0
    %1046 = vmatpush1.msra.mxu0 0.0
    %1047 = vmatprep.subr.mxu0 0.0
    %1048 = vmatpush1.msra.mxu0 0.0
    %1049 = vmatprep.subr.mxu0 0.0
    %1050 = vmatpush1.msra.mxu0 0.0
    %1051 = vmatprep.subr.mxu0 0.0
    %1052 = vmatpush1.msra.mxu0 0.0
    %1053 = vmatprep.subr.mxu0 0.0
    %1054 = vmatpush1.msra.mxu0 0.0
    %1055 = vmatprep.subr.mxu0 0.0
    %1056 = vmatpush1.msra.mxu0 0.0
    %1057 = vmatprep.subr.mxu0 0.0
    %1058 = vmatpush1.msra.mxu0 0.0
    %1059 = vmatprep.subr.mxu0 0.0
    %1060 = vmatpush1.msra.mxu0 0.0
    %1061 = vmatprep.subr.mxu0 0.0
    %1062 = vmatpush1.msra.mxu0 0.0
    %1063 = vmatprep.subr.mxu0 0.0
    %1064 = vmatpush1.msra.mxu0 0.0
    %1065 = vmatprep.subr.mxu0 0.0
    %1066 = vmatpush1.msra.mxu0 0.0
    %1067 = vmatprep.subr.mxu0 0.0
    %1068 = vmatpush1.msra.mxu0 0.0
    %1069 = vmatprep.subr.mxu0 0.0
    %1070 = vmatpush1.msra.mxu0 0.0
    %1071 = vmatprep.subr.mxu0 0.0
    %1072 = vmatpush1.msra.mxu0 0.0
    %1073 = vmatprep.subr.mxu0 0.0
    %1074 = vmatpush1.msra.mxu0 0.0
    %1075 = vmatprep.subr.mxu0 0.0
    %1076 = vmatpush1.msra.mxu0 0.0
    %1077 = vmatprep.subr.mxu0 0.0
    %1078 = vmatpush1.msra.mxu0 0.0
    %1079 = vmatprep.subr.mxu0 0.0
    %1080 = vmatpush1.msra.mxu0 0.0
    %1081 = vmatprep.subr.mxu0 0.0
    %1082 = vmatpush1.msra.mxu0 0.0
    %1083 = vmatprep.subr.mxu0 0.0
    %1084 = vmatpush1.msra.mxu0 0.0
    %1085 = vmatprep.subr.mxu0 0.0
    %1086 = vmatpush1.msra.mxu0 0.0
    %1087 = vmatprep.subr.mxu0 0.0
    %1088 = vmatpush1.msra.mxu0 0.0
    %1089 = vmatprep.subr.mxu0 0.0
    %1090 = vmatpush1.msra.mxu0 0.0
    %1091 = vmatprep.subr.mxu0 0.0
    %1092 = vmatpush1.msra.mxu0 0.0
    %1093 = vmatprep.subr.mxu0 0.0
    %1094 = vmatpush1.msra.mxu0 0.0
    %1095 = vmatprep.subr.mxu0 0.0
    %1096 = vmatpush1.msra.mxu0 0.0
    %1097 = vmatprep.mubr.f32.mxu0 0.0
    %1098 = vmatmul.mubr.f32.gmra.mrb[0].mxu0 %v1029
    %v1099 = vpop.f32.mrb[0].mxu0
    %v1100 = vadd.f32 %v1022, %v1099
    %v1101 = vpop.f32.mrb[0].mxu0
    %1102 = vmatprep.mubr.f32.mxu0 0.0
    %1103 = vmatmul.mubr.f32.gmra.mrb[0].mxu0 %v1031
    %v1104 = vpop.f32.mrb[0].mxu0
    %v1105 = vadd.f32 %v1022, %v1104
    %v1106 = vpop.f32.mrb[0].mxu0
    %1107 = vdwg.mxu0
    %1108 = vmax.xlane.f32.xlu0 %v1100
    %v1109 = vpop.xlane.xlu0 %1108
    %1110 = vmax.xlane.f32.xlu0 %v1105
    %v1111 = vpop.xlane.xlu0 %1110
    %v1112 = vsub.f32 %v1100, %v1109
    %v1113 = vsub.f32 %v1105, %v1111
    %v1114 = vmul.f32 %v1112, 1.442695
    %v1115 = vpow.pop %v1114
    %v1116 = vmul.f32 %v1113, 1.442695
    %v1117 = vpow.pop %v1116
    %1118 = vadd.xlane.f32.xlu0 %v1115
    %v1119 = vpop.xlane.xlu0 %1118
    %1120 = vadd.xlane.f32.xlu0 %v1117
    %v1121 = vpop.xlane.xlu0 %1120
    %v1122 = vlog2.pop %v1119
    %v1123 = vmul.f32 %v1122, 0.6931472
    %v1124 = vlog2.pop %v1121
    %v1125 = vmul.f32 %v1124, 0.6931472
    %v1126 = vadd.f32 %v1109, %v1123
    %v1127 = vadd.f32 %v1111, %v1125
    %v1128 = vlaneseq
    %v1129 = vand.u32 %v1128, 127
    %v1130 = vld [vmem:[%s5] sm:$0xff]
    %v1131 = vld [vmem:[%s5 + $0x8] sm:$0xff]
    %1132 = vset.pattern.permute.xlu0 0
    %1133 = vperm.xlu0 %1132, %v1130
    %v1134 = vpop.permute.xlu0 %1133
    %1135 = vset.pattern.permute.xlu0 0
    %1136 = vperm.xlu0 %1135, %v1131
    %v1137 = vpop.permute.xlu0 %1136
    %vm1138 = vcmp.eq.s32.totalorder %v1129, %v1134
    %vm1139 = vcmp.eq.s32.totalorder %v1129, %v1137
    %v1140 = vsel %vm1138, %v1100, 0.0
    %v1141 = vsel %vm1139, %v1105, 0.0
    %1142 = vadd.xlane.f32.xlu0 %v1140
    %v1143 = vpop.xlane.xlu0 %1142
    %1144 = vadd.xlane.f32.xlu0 %v1141
    %v1145 = vpop.xlane.xlu0 %1144
    %v1146 = vsub.f32 %v1126, %v1143
    %v1147 = vsub.f32 %v1127, %v1145
    %vm1148 = vcmask 7168
    %v1149 = vsel %vm1148, %v1146, 0.0
    %v1150 = vsel %vm1148, %v1147, 0.0
    %v1151 = vadd.f32 %v1149, %v1150
    %1152 = vadd.xlane.f32.xlu0 %v1151
    %v1153 = vpop.xlane.xlu0 %1152
    %v1154 = vrot.slane %v1153, 4
    %v1155 = vadd.f32 %v1153, %v1154
    %v1156 = vrot.slane %v1155, 2
    %v1157 = vadd.f32 %v1155, %v1156
    %v1158 = vrot.slane %v1157, 1
    %v1159 = vadd.f32 %v1157, %v1158
    %s1160 = vtos %v1159
    %v1161 = vstv %s1160
    %v1162 = vmul.f32 %v1161, 0.0625
    %v1163 = vadd.f32 %v58, %v1162
    %vm1164 = vcmask 0
    %1165 = vst.msk [vmem:[#allocation2] sm:$0x1] %vm1164, %v1163
    // Predicated region
    $region26: #{aspect_rs_forward.1} parent=1 // pred_check
      _
    $region27: #{aspect_rs_forward.1} parent=1 // pred_check_branch
      %1167 = sbr.rel (0) target = $region29
    $region28: #{aspect_rs_forward.1} parent=1 // pred_region
      _
    $region29: #{aspect_rs_forward.1} parent=1 // pred_fallthru
      _
    // Predicated region
    $region30: #{aspect_rs_forward.1} parent=1 // pred_check
      _
    $region31: #{aspect_rs_forward.1} parent=1 // pred_check_branch
      %1169 = sbr.rel (0) target = $region33
    $region32: #{aspect_rs_forward.1} parent=1 // pred_region
      %s1171 = ssub.s32 16, 16
      %1172 = vsyncadd [#allocation3], %s1171
      %s1174 = sshll.u32 [#allocation2], 4
      %s1175 = int_to_ptr.vmem [resolvable:$true] %s1174
      %1177 = dma.vmem_to_hbm [thread:$0]  %s1175, 16, %s7, [#allocation3]
    $region33: #{aspect_rs_forward.1} parent=1 // pred_fallthru
      _
    // Predicated region
    $region34: #{aspect_rs_forward.1} parent=1 // pred_check
      _
    $region35: #{aspect_rs_forward.1} parent=1 // pred_check_branch
      %1179 = sbr.rel (0) target = $region37
    $region36: #{aspect_rs_forward.1} parent=1 // pred_region
      _
    $region37: #{aspect_rs_forward.1} parent=1 // pred_fallthru
      _
    // Predicated region
    $region38: #{aspect_rs_forward.1} parent=1 // pred_check
      _
    $region39: #{aspect_rs_forward.1} parent=1 // pred_check_branch
      %1181 = sbr.rel (0) target = $region41
    $region40: #{aspect_rs_forward.1} parent=1 // pred_region
      %1182 = dma.done [#allocation3], 16
    $region41: #{aspect_rs_forward.1} parent=1 // pred_fallthru
      _
    %1183 = vsyncpa [#allocation3], 1

</llo_original>
